<compile_context>
chip_gen: v7x
topology: tpu7x:2x2x1
jax: 0.10.0
libtpu: 0.0.40
codegen_flags: <defaults>
</compile_context>

<pallas_src>
import functools

import jax
import jax.numpy as jnp
from jax.experimental import pallas as pl
from jax.experimental.pallas import tpu as pltpu

_LANE = 128
_SUBLANE = 8


def _round_up(n, m):
    return ((n + m - 1) // m) * m


def _device_kind():
    try:
        return jax.devices()[0].device_kind.lower()
    except Exception:  # pragma: no cover - defensive
        return ""


_KIND = _device_kind()
_IS_V5 = "v5" in _KIND          # no bf16 VALU -> keep elementwise in f32
_IS_V7 = "v7" in _KIND          # 2 TensorCores -> CORE_PARALLEL when possible
_BF16_ACT = not _IS_V5


# --------------------------------------------------------------------- kernel

def _actor_mlp_kernel(ma_ref, x_ref, w1_ref, b1_ref, w2_ref, b2_ref,
                      w3_ref, b3_ref, w4_ref, b4_ref, o_ref, *, bf16_act):
    max_action = ma_ref[0]                       # runtime scalar from SMEM
    x = x_ref[...].astype(jnp.bfloat16)          # no-op if already bf16

    def leaky(acc_f32):
        # leaky_relu(v) = max(v, 0.01*v); padded lanes stay exactly 0.
        if bf16_act:
            a = acc_f32.astype(jnp.bfloat16)     # packed vregs on v6e/v7x
            return jnp.maximum(a, a * 0.01)
        return jnp.maximum(acc_f32, acc_f32 * 0.01).astype(jnp.bfloat16)

    # layer 1: Linear + leaky_relu
    h = leaky(jnp.dot(x, w1_ref[...],
                      preferred_element_type=jnp.float32) + b1_ref[...])
    # layer 2: Linear + leaky_relu
    h = leaky(jnp.dot(h, w2_ref[...],
                      preferred_element_type=jnp.float32) + b2_ref[...])
    # layer 3: Linear + tanh
    h = jnp.tanh(jnp.dot(h, w3_ref[...],
                         preferred_element_type=jnp.float32) + b3_ref[...])
    # layer 4: Linear, then max_action * tanh
    out = max_action * jnp.tanh(
        jnp.dot(h.astype(jnp.bfloat16), w4_ref[...],
                preferred_element_type=jnp.float32) + b4_ref[...])

    o_ref[...] = out.astype(o_ref.dtype)


# ------------------------------------------------------------------ wrapper(s)

def prepare_actor_params(params, weight_dtype=jnp.bfloat16):
    """Pad every (in, out) weight / (1, out) bias to lane multiples of 128 and
    cast weights to bf16.  Done once at param-prep time.  Zero padding is
    exact: leaky_relu(0)=0 and tanh(0)=0, so padded lanes stay zero."""
    prep = {}
    for i in range(1, 5):
        w = jnp.asarray(params[f"w{i}"], jnp.float32)
        b = jnp.asarray(params[f"b{i}"], jnp.float32).reshape(1, -1)
        fi, fo = w.shape
        fi_p, fo_p = _round_up(fi, _LANE), _round_up(fo, _LANE)
        w_p = jnp.zeros((fi_p, fo_p), weight_dtype).at[:fi, :fo].set(
            w.astype(weight_dtype))
        b_p = jnp.zeros((1, fo_p), jnp.float32).at[:, :fo].set(b)
        prep[f"w{i}"] = w_p
        prep[f"b{i}"] = b_p
    prep["gfv_dim"] = int(params["w1"].shape[0])
    prep["z_dim"] = int(params["w4"].shape[1])
    return prep


def _choose_batch_tiling(B, gfv_pad):
    """Pick (TB, nb, B_pad) so that nb*TB >= B with at most 7 wasted rows per
    tile (sublane rounding) and TB <= 512 (1024 for huge batches with small
    feature dims)."""
    B8 = _round_up(B, _SUBLANE)
    tb_cap = 1024 if (B8 >= 4096 and gfv_pad <= 2048) else 512
    nb = max(1, (B8 + tb_cap - 1) // tb_cap)
    TB = _round_up(-(-B8 // nb), _SUBLANE)
    return TB, nb, nb * TB


def _estimate_vmem_bytes(prep, TB, gfv_pad, z_pad, x_itemsize, out_itemsize):
    w_bytes = 0
    for i in range(1, 5):
        w_bytes += int(prep[f"w{i}"].size) * prep[f"w{i}"].dtype.itemsize
        w_bytes += int(prep[f"b{i}"].size) * prep[f"b{i}"].dtype.itemsize
    tile_bytes = TB * gfv_pad * x_itemsize + TB * z_pad * out_itemsize
    # the default pipeline double-buffers every operand
    return 2 * (w_bytes + tile_bytes)


def ddpg_forward(x, prep, max_action, out_dtype=jnp.float32):
    """Pallas TPU implementation of ActorNet.forward (DDPG actor forward).

    x:          (B, ...) — non-batch dims are flattened (torch x.reshape(B,-1))
    prep:       output of prepare_actor_params
    max_action: python float / 0-d array (runtime value, no recompilation)
    out_dtype:  f32 by default; pass jnp.bfloat16 to halve output DMA if the
                consumer tolerates it.
    """
    B = x.shape[0]
    x2 = x.reshape(B, -1)
    if x2.dtype not in (jnp.float32, jnp.bfloat16):
        x2 = x2.astype(jnp.float32)
    gfv_dim = x2.shape[1]
    assert gfv_dim == prep["gfv_dim"], "input feature dim mismatch"

    gfv_pad = prep["w1"].shape[0]
    z_pad = prep["w4"].shape[1]
    z_dim = prep["z_dim"]

    TB, nb, B_pad = _choose_batch_tiling(B, gfv_pad)

    needs_pad = (gfv_dim != gfv_pad) or (B_pad != B)
    if needs_pad:
        # One combined pad + bf16 cast pass (no f32 round-trip). Wastes at
        # most 7 rows per tile; padded rows/lanes are exact zeros.
        x_in = jnp.zeros((B_pad, gfv_pad), jnp.bfloat16)
        x_in = x_in.at[:B, :gfv_dim].set(x2.astype(jnp.bfloat16))
    else:
        # Zero-copy fast path: pass x straight in; bf16 cast happens in-kernel.
        x_in = x2

    ma = jnp.asarray([max_action], dtype=jnp.float32)

    # index_maps receive (grid_i, *scalar_prefetch_refs)
    tiled = lambda i, ma_ref: (i, 0)       # x / out: walk the batch
    resident = lambda i, ma_ref: (0, 0)    # weights/biases: DMA once, stay put

    in_specs = [
        pl.BlockSpec((TB, gfv_pad), tiled),
        pl.BlockSpec(prep["w1"].shape, resident),
        pl.BlockSpec(prep["b1"].shape, resident),
        pl.BlockSpec(prep["w2"].shape, resident),
        pl.BlockSpec(prep["b2"].shape, resident),
        pl.BlockSpec(prep["w3"].shape, resident),
        pl.BlockSpec(prep["b3"].shape, resident),
        pl.BlockSpec(prep["w4"].shape, resident),
        pl.BlockSpec(prep["b4"].shape, resident),
    ]
    out_spec = pl.BlockSpec((TB, z_pad), tiled)

    # v7x: genuinely shard the batch grid across the two TensorCores when the
    # grid is splittable; plain parallel elsewhere.
    if _IS_V7 and nb >= 2 and nb % 2 == 0:
        dim_sem = (pltpu.CORE_PARALLEL,)
    else:
        dim_sem = (pltpu.PARALLEL,)

    # Pre-empt scoped-VMEM exhaustion for very large gfv_dim (mostly v5e's
    # 16 MiB default); never triggered at typical ActorNet sizes.
    est = _estimate_vmem_bytes(prep, TB, gfv_pad, z_pad,
                               x_in.dtype.itemsize,
                               jnp.dtype(out_dtype).itemsize)
    vmem_limit = None
    if est > 12 * 1024 * 1024:
        vmem_limit = min(int(est * 1.25) + (2 << 20), 64 * 1024 * 1024)

    out_padded = pl.pallas_call(
        functools.partial(_actor_mlp_kernel, bf16_act=_BF16_ACT),
        out_shape=jax.ShapeDtypeStruct((B_pad, z_pad), out_dtype),
        grid_spec=pltpu.PrefetchScalarGridSpec(
            num_scalar_prefetch=1,
            grid=(nb,),
            in_specs=in_specs,
            out_specs=out_spec,
        ),
        compiler_params=pltpu.CompilerParams(
            dimension_semantics=dim_sem,
            vmem_limit_bytes=vmem_limit,
        ),
    )(ma, x_in, prep["w1"], prep["b1"], prep["w2"], prep["b2"],
      prep["w3"], prep["b3"], prep["w4"], prep["b4"])

    return out_padded[:B, :z_dim]


# ---------------------------------------------------------------- init / refs

def _xavier_normal(key, fan_in, fan_out):
    # matches nn.init.xavier_normal_: std = sqrt(2 / (fan_in + fan_out))
    std = (2.0 / (fan_in + fan_out)) ** 0.5
    return std * jax.random.normal(key, (fan_in, fan_out), dtype=jnp.float32)


def init_actor_params(key, gfv_dim, z_dim):
    dims = [(gfv_dim, 400), (400, 400), (400, 300), (300, z_dim)]
    params = {}
    keys = jax.random.split(key, 2 * len(dims))
    for i, (fi, fo) in enumerate(dims):
        wk, bk = keys[2 * i], keys[2 * i + 1]
        params[f"w{i + 1}"] = _xavier_normal(wk, fi, fo)
        # PyTorch Linear default bias init: U(-1/sqrt(fan_in), 1/sqrt(fan_in))
        bound = 1.0 / (fi ** 0.5)
        params[f"b{i + 1}"] = jax.random.uniform(
            bk, (1, fo), minval=-bound, maxval=bound, dtype=jnp.float32)
    return params


def _reference_forward_f32(x, params, max_action):
    """Pure-f32 reference matching the PyTorch module semantics."""
    def leaky(v):
        return jnp.where(v > 0, v, 0.01 * v)
    x = x.reshape(x.shape[0], -1)
    h = leaky(x @ params["w1"] + params["b1"])
    h = leaky(h @ params["w2"] + params["b2"])
    h = jnp.tanh(h @ params["w3"] + params["b3"])
    return max_action * jnp.tanh(h @ params["w4"] + params["b4"])


def _reference_forward_matched(x, prep, max_action, bf16_act=_BF16_ACT):
    """Reference applying exactly the kernel's bf16/padding scheme."""
    B = x.shape[0]
    xf = x.reshape(B, -1)
    gfv = xf.shape[1]
    gfv_pad = prep["w1"].shape[0]
    xp = jnp.zeros((B, gfv_pad), jnp.bfloat16).at[:, :gfv].set(
        xf.astype(jnp.bfloat16))

    def leaky(acc):
        if bf16_act:
            a = acc.astype(jnp.bfloat16)
            return jnp.maximum(a, a * 0.01)
        return jnp.maximum(acc, acc * 0.01).astype(jnp.bfloat16)

    h = leaky(jnp.dot(xp, prep["w1"], preferred_element_type=jnp.float32)
              + prep["b1"])
    h = leaky(jnp.dot(h, prep["w2"], preferred_element_type=jnp.float32)
              + prep["b2"])
    h = jnp.tanh(jnp.dot(h, prep["w3"], preferred_element_type=jnp.float32)
                 + prep["b3"])
    out = max_action * jnp.tanh(
        jnp.dot(h.astype(jnp.bfloat16), prep["w4"],
                preferred_element_type=jnp.float32) + prep["b4"])
    return out[:, :prep["z_dim"]]


if __name__ == "__main__":
    key = jax.random.PRNGKey(0)
    k_param, k_x = jax.random.split(key)

    gfv_dim = 128
    z_dim = 32
    batch = 2
    max_action = 10.0

    params = init_actor_params(k_param, gfv_dim, z_dim)
    prep = prepare_actor_params(params)
    x = jax.random.normal(k_x, (batch, gfv_dim), dtype=jnp.float32)

    out = jax.block_until_ready(ddpg_forward(x, prep, max_action))
    assert out.shape == (batch, z_dim)

    # Tight check against a reference using the exact bf16/padded math.
    ref_matched = _reference_forward_matched(x, prep, max_action)
    assert jnp.allclose(out, ref_matched, atol=2e-3, rtol=2e-3), \
        "mismatch vs bf16-matched reference"

    # Loose semantic check against the full-f32 PyTorch-equivalent reference
    # (bf16 weights introduce ~1% relative error before the final tanh*10).
    ref_f32 = _reference_forward_f32(x, params, max_action)
    assert jnp.allclose(out, ref_f32, atol=3e-1, rtol=5e-2), \
        "mismatch vs f32 reference"

    print("KERNEL_OK")
</pallas_src>

<mosaic_0001>
module attributes {stable_mosaic.version = 11 : i64} {
  func.func @_actor_mlp_kernel(%arg0: i32, %arg1: memref<1xf32, #tpu.memory_space<smem>>, %arg2: memref<8x128xbf16, #tpu.memory_space<vmem>>, %arg3: memref<128x512xbf16, #tpu.memory_space<vmem>>, %arg4: memref<1x512xf32, #tpu.memory_space<vmem>>, %arg5: memref<512x512xbf16, #tpu.memory_space<vmem>>, %arg6: memref<1x512xf32, #tpu.memory_space<vmem>>, %arg7: memref<512x384xbf16, #tpu.memory_space<vmem>>, %arg8: memref<1x384xf32, #tpu.memory_space<vmem>>, %arg9: memref<384x128xbf16, #tpu.memory_space<vmem>>, %arg10: memref<1x128xf32, #tpu.memory_space<vmem>>, %arg11: memref<8x128xf32, #tpu.memory_space<vmem>>) attributes {dimension_semantics = [#tpu.dimension_semantics<parallel>], iteration_bounds = array<i64: 1>, scalar_prefetch = 1 : i64, scratch_operands = 0 : i64, tpu.core_type = #tpu.core_type<tc>, window_params = [{transform_indices = @transform_0, window_bounds = array<i64: 8, 128>}, {pipeline_mode = #tpu.pipeline_mode<synchronous>, transform_indices = @transform_1, window_bounds = array<i64: 128, 512>}, {pipeline_mode = #tpu.pipeline_mode<synchronous>, transform_indices = @transform_2, window_bounds = array<i64: 1, 512>}, {pipeline_mode = #tpu.pipeline_mode<synchronous>, transform_indices = @transform_3, window_bounds = array<i64: 512, 512>}, {pipeline_mode = #tpu.pipeline_mode<synchronous>, transform_indices = @transform_4, window_bounds = array<i64: 1, 512>}, {pipeline_mode = #tpu.pipeline_mode<synchronous>, transform_indices = @transform_5, window_bounds = array<i64: 512, 384>}, {pipeline_mode = #tpu.pipeline_mode<synchronous>, transform_indices = @transform_6, window_bounds = array<i64: 1, 384>}, {pipeline_mode = #tpu.pipeline_mode<synchronous>, transform_indices = @transform_7, window_bounds = array<i64: 384, 128>}, {pipeline_mode = #tpu.pipeline_mode<synchronous>, transform_indices = @transform_8, window_bounds = array<i64: 1, 128>}, {transform_indices = @transform_9, window_bounds = array<i64: 8, 128>}]} {
    %c0 = arith.constant 0 : index
    %0 = memref.load %arg1[%c0] : memref<1xf32, #tpu.memory_space<smem>>
    %c0_0 = arith.constant 0 : index
    %c0_1 = arith.constant 0 : index
    %1 = vector.load %arg2[%c0_0, %c0_1] : memref<8x128xbf16, #tpu.memory_space<vmem>>, vector<8x128xbf16>
    %c0_2 = arith.constant 0 : index
    %c0_3 = arith.constant 0 : index
    %2 = vector.load %arg3[%c0_2, %c0_3] : memref<128x512xbf16, #tpu.memory_space<vmem>>, vector<128x512xbf16>
    %cst = arith.constant dense<0.000000e+00> : vector<8x512xf32>
    %3 = tpu.matmul %1, %2, %cst {dimension_numbers = #tpu.dot_dimension_numbers<[1], [0], [0], [1], [0, 0, 1, 1], [], []>} : vector<8x128xbf16>, vector<128x512xbf16>, vector<8x512xf32> -> vector<8x512xf32>
    %c0_4 = arith.constant 0 : index
    %c0_5 = arith.constant 0 : index
    %4 = vector.load %arg4[%c0_4, %c0_5] : memref<1x512xf32, #tpu.memory_space<vmem>>, vector<1x512xf32>
    %5 = vector.broadcast %4 : vector<1x512xf32> to vector<8x512xf32>
    %6 = arith.addf %3, %5 : vector<8x512xf32>
    %7 = arith.truncf %6 : vector<8x512xf32> to vector<8x512xbf16>
    %cst_6 = arith.constant 1.000980e-02 : bf16
    %8 = vector.broadcast %cst_6 : bf16 to vector<8x512xbf16>
    %9 = arith.mulf %7, %8 : vector<8x512xbf16>
    %10 = arith.maximumf %7, %9 : vector<8x512xbf16>
    %c0_7 = arith.constant 0 : index
    %c0_8 = arith.constant 0 : index
    %11 = vector.load %arg5[%c0_7, %c0_8] : memref<512x512xbf16, #tpu.memory_space<vmem>>, vector<512x512xbf16>
    %cst_9 = arith.constant dense<0.000000e+00> : vector<8x512xf32>
    %12 = tpu.matmul %10, %11, %cst_9 {dimension_numbers = #tpu.dot_dimension_numbers<[1], [0], [0], [1], [0, 0, 1, 1], [], []>} : vector<8x512xbf16>, vector<512x512xbf16>, vector<8x512xf32> -> vector<8x512xf32>
    %c0_10 = arith.constant 0 : index
    %c0_11 = arith.constant 0 : index
    %13 = vector.load %arg6[%c0_10, %c0_11] : memref<1x512xf32, #tpu.memory_space<vmem>>, vector<1x512xf32>
    %14 = vector.broadcast %13 : vector<1x512xf32> to vector<8x512xf32>
    %15 = arith.addf %12, %14 : vector<8x512xf32>
    %16 = arith.truncf %15 : vector<8x512xf32> to vector<8x512xbf16>
    %cst_12 = arith.constant 1.000980e-02 : bf16
    %17 = vector.broadcast %cst_12 : bf16 to vector<8x512xbf16>
    %18 = arith.mulf %16, %17 : vector<8x512xbf16>
    %19 = arith.maximumf %16, %18 : vector<8x512xbf16>
    %c0_13 = arith.constant 0 : index
    %c0_14 = arith.constant 0 : index
    %20 = vector.load %arg7[%c0_13, %c0_14] : memref<512x384xbf16, #tpu.memory_space<vmem>>, vector<512x384xbf16>
    %cst_15 = arith.constant dense<0.000000e+00> : vector<8x384xf32>
    %21 = tpu.matmul %19, %20, %cst_15 {dimension_numbers = #tpu.dot_dimension_numbers<[1], [0], [0], [1], [0, 0, 1, 1], [], []>} : vector<8x512xbf16>, vector<512x384xbf16>, vector<8x384xf32> -> vector<8x384xf32>
    %c0_16 = arith.constant 0 : index
    %c0_17 = arith.constant 0 : index
    %22 = vector.load %arg8[%c0_16, %c0_17] : memref<1x384xf32, #tpu.memory_space<vmem>>, vector<1x384xf32>
    %23 = vector.broadcast %22 : vector<1x384xf32> to vector<8x384xf32>
    %24 = arith.addf %21, %23 : vector<8x384xf32>
    %25 = math.tanh %24 : vector<8x384xf32>
    %26 = arith.truncf %25 : vector<8x384xf32> to vector<8x384xbf16>
    %c0_18 = arith.constant 0 : index
    %c0_19 = arith.constant 0 : index
    %27 = vector.load %arg9[%c0_18, %c0_19] : memref<384x128xbf16, #tpu.memory_space<vmem>>, vector<384x128xbf16>
    %cst_20 = arith.constant dense<0.000000e+00> : vector<8x128xf32>
    %28 = tpu.matmul %26, %27, %cst_20 {dimension_numbers = #tpu.dot_dimension_numbers<[1], [0], [0], [1], [0, 0, 1, 1], [], []>} : vector<8x384xbf16>, vector<384x128xbf16>, vector<8x128xf32> -> vector<8x128xf32>
    %c0_21 = arith.constant 0 : index
    %c0_22 = arith.constant 0 : index
    %29 = vector.load %arg10[%c0_21, %c0_22] : memref<1x128xf32, #tpu.memory_space<vmem>>, vector<1x128xf32>
    %30 = vector.broadcast %29 : vector<1x128xf32> to vector<8x128xf32>
    %31 = arith.addf %28, %30 : vector<8x128xf32>
    %32 = math.tanh %31 : vector<8x128xf32>
    %33 = vector.broadcast %0 : f32 to vector<8x128xf32>
    %34 = arith.mulf %33, %32 : vector<8x128xf32>
    %c0_23 = arith.constant 0 : index
    %c0_24 = arith.constant 0 : index
    %35 = vector.load %arg11[%c0_23, %c0_24] : memref<8x128xf32, #tpu.memory_space<vmem>>, vector<8x128xf32>
    tpu.vector_store %arg11[%c0_23, %c0_24], %34 {strides = array<i32>} : memref<8x128xf32, #tpu.memory_space<vmem>>, vector<8x128xf32>,
    return
  }
  func.func @transform_0(%arg0: i32, %arg1: memref<1xf32, #tpu.memory_space<smem>>) -> (i32, i32) {
    %c0_i32 = arith.constant 0 : i32
    %c0_i32_0 = arith.constant 0 : i32
    return %arg0, %c0_i32 : i32, i32
  }
  func.func @transform_1(%arg0: i32, %arg1: memref<1xf32, #tpu.memory_space<smem>>) -> (i32, i32) {
    %c0_i32 = arith.constant 0 : i32
    %c0_i32_0 = arith.constant 0 : i32
    %c0_i32_1 = arith.constant 0 : i32
    return %c0_i32, %c0_i32_0 : i32, i32
  }
  func.func @transform_2(%arg0: i32, %arg1: memref<1xf32, #tpu.memory_space<smem>>) -> (i32, i32) {
    %c0_i32 = arith.constant 0 : i32
    %c0_i32_0 = arith.constant 0 : i32
    %c0_i32_1 = arith.constant 0 : i32
    return %c0_i32, %c0_i32_0 : i32, i32
  }
  func.func @transform_3(%arg0: i32, %arg1: memref<1xf32, #tpu.memory_space<smem>>) -> (i32, i32) {
    %c0_i32 = arith.constant 0 : i32
    %c0_i32_0 = arith.constant 0 : i32
    %c0_i32_1 = arith.constant 0 : i32
    return %c0_i32, %c0_i32_0 : i32, i32
  }
  func.func @transform_4(%arg0: i32, %arg1: memref<1xf32, #tpu.memory_space<smem>>) -> (i32, i32) {
    %c0_i32 = arith.constant 0 : i32
    %c0_i32_0 = arith.constant 0 : i32
    %c0_i32_1 = arith.constant 0 : i32
    return %c0_i32, %c0_i32_0 : i32, i32
  }
  func.func @transform_5(%arg0: i32, %arg1: memref<1xf32, #tpu.memory_space<smem>>) -> (i32, i32) {
    %c0_i32 = arith.constant 0 : i32
    %c0_i32_0 = arith.constant 0 : i32
    %c0_i32_1 = arith.constant 0 : i32
    return %c0_i32, %c0_i32_0 : i32, i32
  }
  func.func @transform_6(%arg0: i32, %arg1: memref<1xf32, #tpu.memory_space<smem>>) -> (i32, i32) {
    %c0_i32 = arith.constant 0 : i32
    %c0_i32_0 = arith.constant 0 : i32
    %c0_i32_1 = arith.constant 0 : i32
    return %c0_i32, %c0_i32_0 : i32, i32
  }
  func.func @transform_7(%arg0: i32, %arg1: memref<1xf32, #tpu.memory_space<smem>>) -> (i32, i32) {
    %c0_i32 = arith.constant 0 : i32
    %c0_i32_0 = arith.constant 0 : i32
    %c0_i32_1 = arith.constant 0 : i32
    return %c0_i32, %c0_i32_0 : i32, i32
  }
  func.func @transform_8(%arg0: i32, %arg1: memref<1xf32, #tpu.memory_space<smem>>) -> (i32, i32) {
    %c0_i32 = arith.constant 0 : i32
    %c0_i32_0 = arith.constant 0 : i32
    %c0_i32_1 = arith.constant 0 : i32
    return %c0_i32, %c0_i32_0 : i32, i32
  }
  func.func @transform_9(%arg0: i32, %arg1: memref<1xf32, #tpu.memory_space<smem>>) -> (i32, i32) {
    %c0_i32 = arith.constant 0 : i32
    %c0_i32_0 = arith.constant 0 : i32
    return %arg0, %c0_i32 : i32, i32
  }
}

</mosaic_0001>

<llo_original>
// kernel: tpu_custom_call.1
$region0: #{tpu_custom_call.1}
  #allocation0 [shape = 'u32[]', space=smem, size = 0x4, offset = 0x4, fixed_abs, tag = 'smem constant byte address 0x4 - core index']
  #allocation1 [shape = 'u32[144,128]{1,0:T(1,128)}', space=vmem, size = 0x12000, scoped, tag = 'internal scratch']
  #allocation2 [shape = 's32[1]{0}', space=sflag, size = 0x4, scoped, tag = 'scoped memory for tpu_custom_call.1']
  #allocation3 [shape = 'f32[1]{0:T(128)S(6)}', space=smem, size = 0x200, scoped, tag = 'prefetched SMEM operand 0']
  %s0 = inlined_call_operand.<no memory space> [shape: f32[1], index: 0, kind: input, shape index: {}]
  %s1 = inlined_call_operand.hbm [shape: bf16[8,128], index: 1, kind: input, shape index: {}]
  %s2 = inlined_call_operand.hbm [shape: bf16[128,512], index: 2, kind: input, shape index: {}]
  %s3 = inlined_call_operand.vmem [shape: f32[1,512], index: 3, kind: input, shape index: {}]
  %s4 = inlined_call_operand.hbm [shape: bf16[512,512], index: 4, kind: input, shape index: {}]
  %s5 = inlined_call_operand.vmem [shape: f32[1,512], index: 5, kind: input, shape index: {}]
  %s6 = inlined_call_operand.hbm [shape: bf16[512,384], index: 6, kind: input, shape index: {}]
  %s7 = inlined_call_operand.vmem [shape: f32[1,384], index: 7, kind: input, shape index: {}]
  %s8 = inlined_call_operand.hbm [shape: bf16[384,128], index: 8, kind: input, shape index: {}]
  %s9 = inlined_call_operand.vmem [shape: f32[1,128], index: 9, kind: input, shape index: {}]
  %s10 = inlined_call_operand.hbm [shape: f32[8,128], index: 10, kind: output, shape index: {}]
  %s11 = sld [smem:[#allocation0]]
  $region66: #{tpu_custom_call.1} parent=0
    _
  %s13 = ssub.s32 1, %s11
  %s14 = scalar_select 0, %s13, %s11
  %15 = sst [smem:[#allocation3]] %s0
  $region1: #{tpu_custom_call.1} parent=0
    #allocation4 [shape = 'u8[2048]{0}', space=vmem, size = 0x800, scoped, tag = 'input window, operand 1, single buffered']
    #allocation5 [shape = 's32[1]{0}', space=sflag, size = 0x4, scoped, tag = 'scoped memory for tpu_custom_call.1']
    #allocation6 [shape = 's32[1]{0}', space=sflag, size = 0x4, scoped, tag = 'scoped memory for tpu_custom_call.1']
    #allocation7 [shape = 'u8[131072]{0}', space=vmem, size = 0x20000, scoped, tag = 'input window, operand 2, single buffered']
    #allocation8 [shape = 's32[1]{0}', space=sflag, size = 0x4, scoped, tag = 'scoped memory for tpu_custom_call.1']
    #allocation9 [shape = 'u8[524288]{0}', space=vmem, size = 0x80000, scoped, tag = 'input window, operand 4, single buffered']
    #allocation10 [shape = 'u8[393216]{0}', space=vmem, size = 0x60000, scoped, tag = 'input window, operand 6, single buffered']
    #allocation11 [shape = 's32[1]{0}', space=sflag, size = 0x4, scoped, tag = 'scoped memory for tpu_custom_call.1']
    #allocation12 [shape = 'u8[98304]{0}', space=vmem, size = 0x18000, scoped, tag = 'input window, operand 8, single buffered']
    #allocation13 [shape = 'u8[4096]{0}', space=vmem, size = 0x1000, scoped, tag = 'output window, operand 0, single buffered']
    %16 = vsyncpa [#allocation5], 0
    %17 = vsyncpa [#allocation8], 0
    %18 = vsyncpa [#allocation11], 0
    %19 = vsyncpa [#allocation6], 0
    // Predicated region
    $region2: #{tpu_custom_call.1} parent=1 // pred_check
      _
    $region3: #{tpu_custom_call.1} parent=1 // pred_check_branch
      %21 = sbr.rel (0) target = $region5
    $region4: #{tpu_custom_call.1} parent=1 // pred_region
      %s23 = ssub.s32 64, 64
      %24 = vsyncadd [#allocation5], %s23
      %s26 = sshll.u32 [#allocation4], 4
      %s27 = int_to_ptr.vmem [resolvable:$true] %s26
      %29 = dma.hbm_to_vmem [thread:$0]  %s1, 64, %s27, [#allocation5]
    $region5: #{tpu_custom_call.1} parent=1 // pred_fallthru
      _
    // Predicated region
    $region6: #{tpu_custom_call.1} parent=1 // pred_check
      _
    $region7: #{tpu_custom_call.1} parent=1 // pred_check_branch
      %31 = sbr.rel (0) target = $region9
    $region8: #{tpu_custom_call.1} parent=1 // pred_region
      %s33 = ssub.s32 4096, 4096
      %34 = vsyncadd [#allocation8], %s33
      %s35 = sshll.u32 [#allocation7], 4
      %s36 = int_to_ptr.vmem [resolvable:$true] %s35
      %41 = dma.hbm_to_vmem [thread:$0]  %s2, 4096, %s36, [#allocation8], 256, 256, 16
    $region9: #{tpu_custom_call.1} parent=1 // pred_fallthru
      _
    // Predicated region
    $region10: #{tpu_custom_call.1} parent=1 // pred_check
      _
    $region11: #{tpu_custom_call.1} parent=1 // pred_check_branch
      %43 = sbr.rel (0) target = $region13
    $region12: #{tpu_custom_call.1} parent=1 // pred_region
      _
    $region13: #{tpu_custom_call.1} parent=1 // pred_fallthru
      _
    // Predicated region
    $region14: #{tpu_custom_call.1} parent=1 // pred_check
      _
    $region15: #{tpu_custom_call.1} parent=1 // pred_check_branch
      %45 = sbr.rel (0) target = $region17
    $region16: #{tpu_custom_call.1} parent=1 // pred_region
      %s47 = ssub.s32 16384, 16384
      %48 = vsyncadd [#allocation8], %s47
      %s49 = sshll.u32 [#allocation9], 4
      %s50 = int_to_ptr.vmem [resolvable:$true] %s49
      %55 = dma.hbm_to_vmem [thread:$0]  %s4, 16384, %s50, [#allocation8], 256, 256, 16
    $region17: #{tpu_custom_call.1} parent=1 // pred_fallthru
      _
    // Predicated region
    $region18: #{tpu_custom_call.1} parent=1 // pred_check
      _
    $region19: #{tpu_custom_call.1} parent=1 // pred_check_branch
      %57 = sbr.rel (0) target = $region21
    $region20: #{tpu_custom_call.1} parent=1 // pred_region
      _
    $region21: #{tpu_custom_call.1} parent=1 // pred_fallthru
      _
    // Predicated region
    $region22: #{tpu_custom_call.1} parent=1 // pred_check
      _
    $region23: #{tpu_custom_call.1} parent=1 // pred_check_branch
      %59 = sbr.rel (0) target = $region25
    $region24: #{tpu_custom_call.1} parent=1 // pred_region
      %s61 = ssub.s32 12288, 12288
      %62 = vsyncadd [#allocation11], %s61
      %s63 = sshll.u32 [#allocation10], 4
      %s64 = int_to_ptr.vmem [resolvable:$true] %s63
      %69 = dma.hbm_to_vmem [thread:$0]  %s6, 12288, %s64, [#allocation11], 192, 192, 12
    $region25: #{tpu_custom_call.1} parent=1 // pred_fallthru
      _
    // Predicated region
    $region26: #{tpu_custom_call.1} parent=1 // pred_check
      _
    $region27: #{tpu_custom_call.1} parent=1 // pred_check_branch
      %71 = sbr.rel (0) target = $region29
    $region28: #{tpu_custom_call.1} parent=1 // pred_region
      _
    $region29: #{tpu_custom_call.1} parent=1 // pred_fallthru
      _
    // Predicated region
    $region30: #{tpu_custom_call.1} parent=1 // pred_check
      _
    $region31: #{tpu_custom_call.1} parent=1 // pred_check_branch
      %73 = sbr.rel (0) target = $region33
    $region32: #{tpu_custom_call.1} parent=1 // pred_region
      %s75 = ssub.s32 3072, 3072
      %76 = vsyncadd [#allocation11], %s75
      %s77 = sshll.u32 [#allocation12], 4
      %s78 = int_to_ptr.vmem [resolvable:$true] %s77
      %83 = dma.hbm_to_vmem [thread:$0]  %s8, 3072, %s78, [#allocation11], 64, 64, 4
    $region33: #{tpu_custom_call.1} parent=1 // pred_fallthru
      _
    // Predicated region
    $region34: #{tpu_custom_call.1} parent=1 // pred_check
      _
    $region35: #{tpu_custom_call.1} parent=1 // pred_check_branch
      %85 = sbr.rel (0) target = $region37
    $region36: #{tpu_custom_call.1} parent=1 // pred_region
      _
    $region37: #{tpu_custom_call.1} parent=1 // pred_fallthru
      _
    // Predicated region
    $region38: #{tpu_custom_call.1} parent=1 // pred_check
      _
    $region39: #{tpu_custom_call.1} parent=1 // pred_check_branch
      %87 = sbr.rel (0) target = $region41
    $region40: #{tpu_custom_call.1} parent=1 // pred_region
      %88 = dma.done [#allocation5], 64
    $region41: #{tpu_custom_call.1} parent=1 // pred_fallthru
      _
    // Predicated region
    $region42: #{tpu_custom_call.1} parent=1 // pred_check
      _
    $region43: #{tpu_custom_call.1} parent=1 // pred_check_branch
      %90 = sbr.rel (0) target = $region45
    $region44: #{tpu_custom_call.1} parent=1 // pred_region
      %91 = dma.done [#allocation8], 4096
    $region45: #{tpu_custom_call.1} parent=1 // pred_fallthru
      _
    // Predicated region
    $region46: #{tpu_custom_call.1} parent=1 // pred_check
      _
    $region47: #{tpu_custom_call.1} parent=1 // pred_check_branch
      %93 = sbr.rel (0) target = $region49
    $region48: #{tpu_custom_call.1} parent=1 // pred_region
      %94 = dma.done [#allocation8], 16384
    $region49: #{tpu_custom_call.1} parent=1 // pred_fallthru
      _
    // Predicated region
    $region50: #{tpu_custom_call.1} parent=1 // pred_check
      _
    $region51: #{tpu_custom_call.1} parent=1 // pred_check_branch
      %96 = sbr.rel (0) target = $region53
    $region52: #{tpu_custom_call.1} parent=1 // pred_region
      %97 = dma.done [#allocation11], 12288
    $region53: #{tpu_custom_call.1} parent=1 // pred_fallthru
      _
    // Predicated region
    $region54: #{tpu_custom_call.1} parent=1 // pred_check
      _
    $region55: #{tpu_custom_call.1} parent=1 // pred_check_branch
      %99 = sbr.rel (0) target = $region57
    $region56: #{tpu_custom_call.1} parent=1 // pred_region
      %100 = dma.done [#allocation11], 3072
    $region57: #{tpu_custom_call.1} parent=1 // pred_fallthru
      _
    %s103 = sld [smem:[#allocation3]]
    %v104 = vld [vmem:[#allocation4] sm:$0xf]
    %v105 = vld [vmem:[#allocation7] sm:$0xff]
    %v106 = vld [vmem:[#allocation7 + $0x8] sm:$0xff]
    %v107 = vld [vmem:[#allocation7 + $0x10] sm:$0xff]
    %v108 = vld [vmem:[#allocation7 + $0x18] sm:$0xff]
    %v109 = vld [vmem:[#allocation7 + $0x20] sm:$0xff]
    %v110 = vld [vmem:[#allocation7 + $0x28] sm:$0xff]
    %v111 = vld [vmem:[#allocation7 + $0x30] sm:$0xff]
    %v112 = vld [vmem:[#allocation7 + $0x38] sm:$0xff]
    %v113 = vld [vmem:[#allocation7 + $0x40] sm:$0xff]
    %v114 = vld [vmem:[#allocation7 + $0x48] sm:$0xff]
    %v115 = vld [vmem:[#allocation7 + $0x50] sm:$0xff]
    %v116 = vld [vmem:[#allocation7 + $0x58] sm:$0xff]
    %v117 = vld [vmem:[#allocation7 + $0x60] sm:$0xff]
    %v118 = vld [vmem:[#allocation7 + $0x68] sm:$0xff]
    %v119 = vld [vmem:[#allocation7 + $0x70] sm:$0xff]
    %v120 = vld [vmem:[#allocation7 + $0x78] sm:$0xff]
    %v121 = vld [vmem:[#allocation7 + $0x80] sm:$0xff]
    %v122 = vld [vmem:[#allocation7 + $0x88] sm:$0xff]
    %v123 = vld [vmem:[#allocation7 + $0x90] sm:$0xff]
    %v124 = vld [vmem:[#allocation7 + $0x98] sm:$0xff]
    %v125 = vld [vmem:[#allocation7 + $0xa0] sm:$0xff]
    %v126 = vld [vmem:[#allocation7 + $0xa8] sm:$0xff]
    %v127 = vld [vmem:[#allocation7 + $0xb0] sm:$0xff]
    %v128 = vld [vmem:[#allocation7 + $0xb8] sm:$0xff]
    %v129 = vld [vmem:[#allocation7 + $0xc0] sm:$0xff]
    %v130 = vld [vmem:[#allocation7 + $0xc8] sm:$0xff]
    %v131 = vld [vmem:[#allocation7 + $0xd0] sm:$0xff]
    %v132 = vld [vmem:[#allocation7 + $0xd8] sm:$0xff]
    %v133 = vld [vmem:[#allocation7 + $0xe0] sm:$0xff]
    %v134 = vld [vmem:[#allocation7 + $0xe8] sm:$0xff]
    %v135 = vld [vmem:[#allocation7 + $0xf0] sm:$0xff]
    %v136 = vld [vmem:[#allocation7 + $0xf8] sm:$0xff]
    %v137 = vld [vmem:[%s3] sm:$0xf]
    %v139 = vlaneseq
    %v140 = vshrl.u32 %v139, 7
    %v141 = vsub.s32 0, %v140
    %v142 = vrot.slane %v137, %v141
    %v143 = vlaneseq
    %v144 = vshrl.u32 %v143, 7
    %v145 = vsub.s32 1, %v144
    %v146 = vrot.slane %v137, %v145
    %v147 = vlaneseq
    %v148 = vshrl.u32 %v147, 7
    %v149 = vsub.s32 2, %v148
    %v150 = vrot.slane %v137, %v149
    %v151 = vlaneseq
    %v152 = vshrl.u32 %v151, 7
    %v153 = vsub.s32 3, %v152
    %v154 = vrot.slane %v137, %v153
    %v191 = vunpack.c.l.b16 %v105
    %v192 = vunpack.c.h.b16 %v105
    %v193 = vunpack.c.l.b16 %v106
    %v194 = vunpack.c.h.b16 %v106
    %v195 = vunpack.c.l.b16 %v107
    %v196 = vunpack.c.h.b16 %v107
    %v197 = vunpack.c.l.b16 %v108
    %v198 = vunpack.c.h.b16 %v108
    %v199 = vunpack.c.l.b16 %v109
    %v200 = vunpack.c.h.b16 %v109
    %v201 = vunpack.c.l.b16 %v110
    %v202 = vunpack.c.h.b16 %v110
    %v203 = vunpack.c.l.b16 %v111
    %v204 = vunpack.c.h.b16 %v111
    %v205 = vunpack.c.l.b16 %v112
    %v206 = vunpack.c.h.b16 %v112
    %v207 = vunpack.c.l.b16 %v113
    %v208 = vunpack.c.h.b16 %v113
    %v209 = vunpack.c.l.b16 %v114
    %v210 = vunpack.c.h.b16 %v114
    %v211 = vunpack.c.l.b16 %v115
    %v212 = vunpack.c.h.b16 %v115
    %v213 = vunpack.c.l.b16 %v116
    %v214 = vunpack.c.h.b16 %v116
    %v215 = vunpack.c.l.b16 %v117
    %v216 = vunpack.c.h.b16 %v117
    %v217 = vunpack.c.l.b16 %v118
    %v218 = vunpack.c.h.b16 %v118
    %v219 = vunpack.c.l.b16 %v119
    %v220 = vunpack.c.h.b16 %v119
    %v221 = vunpack.c.l.b16 %v120
    %v222 = vunpack.c.h.b16 %v120
    %v223 = vunpack.c.l.b16 %v121
    %v224 = vunpack.c.h.b16 %v121
    %v225 = vunpack.c.l.b16 %v122
    %v226 = vunpack.c.h.b16 %v122
    %v227 = vunpack.c.l.b16 %v123
    %v228 = vunpack.c.h.b16 %v123
    %v229 = vunpack.c.l.b16 %v124
    %v230 = vunpack.c.h.b16 %v124
    %v231 = vunpack.c.l.b16 %v125
    %v232 = vunpack.c.h.b16 %v125
    %v233 = vunpack.c.l.b16 %v126
    %v234 = vunpack.c.h.b16 %v126
    %v235 = vunpack.c.l.b16 %v127
    %v236 = vunpack.c.h.b16 %v127
    %v237 = vunpack.c.l.b16 %v128
    %v238 = vunpack.c.h.b16 %v128
    %v239 = vunpack.c.l.b16 %v129
    %v240 = vunpack.c.h.b16 %v129
    %v241 = vunpack.c.l.b16 %v130
    %v242 = vunpack.c.h.b16 %v130
    %v243 = vunpack.c.l.b16 %v131
    %v244 = vunpack.c.h.b16 %v131
    %v245 = vunpack.c.l.b16 %v132
    %v246 = vunpack.c.h.b16 %v132
    %v247 = vunpack.c.l.b16 %v133
    %v248 = vunpack.c.h.b16 %v133
    %v249 = vunpack.c.l.b16 %v134
    %v250 = vunpack.c.h.b16 %v134
    %v251 = vunpack.c.l.b16 %v135
    %v252 = vunpack.c.h.b16 %v135
    %v253 = vunpack.c.l.b16 %v136
    %v254 = vunpack.c.h.b16 %v136
    %v255 = vpack.c.b16 %v195, %v191
    %v256 = vpack.c.b16 %v196, %v192
    %v257 = vpack.c.b16 %v197, %v193
    %v258 = vpack.c.b16 %v198, %v194
    %v259 = vpack.c.b16 %v203, %v199
    %v260 = vpack.c.b16 %v204, %v200
    %v261 = vpack.c.b16 %v205, %v201
    %v262 = vpack.c.b16 %v206, %v202
    %v263 = vpack.c.b16 %v211, %v207
    %v264 = vpack.c.b16 %v212, %v208
    %v265 = vpack.c.b16 %v213, %v209
    %v266 = vpack.c.b16 %v214, %v210
    %v267 = vpack.c.b16 %v219, %v215
    %v268 = vpack.c.b16 %v220, %v216
    %v269 = vpack.c.b16 %v221, %v217
    %v270 = vpack.c.b16 %v222, %v218
    %v271 = vpack.c.b16 %v227, %v223
    %v272 = vpack.c.b16 %v228, %v224
    %v273 = vpack.c.b16 %v229, %v225
    %v274 = vpack.c.b16 %v230, %v226
    %v275 = vpack.c.b16 %v235, %v231
    %v276 = vpack.c.b16 %v236, %v232
    %v277 = vpack.c.b16 %v237, %v233
    %v278 = vpack.c.b16 %v238, %v234
    %v279 = vpack.c.b16 %v243, %v239
    %v280 = vpack.c.b16 %v244, %v240
    %v281 = vpack.c.b16 %v245, %v241
    %v282 = vpack.c.b16 %v246, %v242
    %v283 = vpack.c.b16 %v251, %v247
    %v284 = vpack.c.b16 %v252, %v248
    %v285 = vpack.c.b16 %v253, %v249
    %v286 = vpack.c.b16 %v254, %v250
    %319 = vmatprep.subr.bf16.mxu0 %v256
    %320 = vmatpush1.bf16.msra.mxu0 %v255
    %321 = vmatprep.subr.bf16.mxu0 %v260
    %322 = vmatpush1.bf16.msra.mxu0 %v259
    %323 = vmatprep.subr.bf16.mxu0 %v264
    %324 = vmatpush1.bf16.msra.mxu0 %v263
    %325 = vmatprep.subr.bf16.mxu0 %v268
    %326 = vmatpush1.bf16.msra.mxu0 %v267
    %327 = vmatprep.subr.bf16.mxu0 %v272
    %328 = vmatpush1.bf16.msra.mxu0 %v271
    %329 = vmatprep.subr.bf16.mxu0 %v276
    %330 = vmatpush1.bf16.msra.mxu0 %v275
    %331 = vmatprep.subr.bf16.mxu0 %v280
    %332 = vmatpush1.bf16.msra.mxu0 %v279
    %333 = vmatprep.subr.bf16.mxu0 %v284
    %334 = vmatpush1.bf16.msra.mxu0 %v283
    %335 = vmatprep.subr.bf16.mxu0 0
    %336 = vmatpush1.bf16.msra.mxu0 0
    %337 = vmatprep.subr.bf16.mxu0 0
    %338 = vmatpush1.bf16.msra.mxu0 0
    %339 = vmatprep.subr.bf16.mxu0 0
    %340 = vmatpush1.bf16.msra.mxu0 0
    %341 = vmatprep.subr.bf16.mxu0 0
    %342 = vmatpush1.bf16.msra.mxu0 0
    %343 = vmatprep.subr.bf16.mxu0 0
    %344 = vmatpush1.bf16.msra.mxu0 0
    %345 = vmatprep.subr.bf16.mxu0 0
    %346 = vmatpush1.bf16.msra.mxu0 0
    %347 = vmatprep.subr.bf16.mxu0 0
    %348 = vmatpush1.bf16.msra.mxu0 0
    %349 = vmatprep.subr.bf16.mxu0 0
    %350 = vmatpush1.bf16.msra.mxu0 0
    %351 = vmatprep.mubr.bf16.mxu0 0
    %352 = vmatmul.mubr.bf16.gmra.mrb[0].mxu0 %v104
    %v353 = vpop.f32.mrb[0].mxu0
    %v354 = vadd.f32 %v142, %v353
    %v355 = vpop.f32.mrb[0].mxu0
    %v356 = vadd.f32 %v146, %v355
    %v357 = vpop.f32.mrb[0].mxu0
    %v358 = vpop.f32.mrb[0].mxu0
    %359 = vdwg.mxu0
    %360 = vmatprep.subr.bf16.mxu0 %v258
    %361 = vmatpush1.bf16.msra.mxu0 %v257
    %362 = vmatprep.subr.bf16.mxu0 %v262
    %363 = vmatpush1.bf16.msra.mxu0 %v261
    %364 = vmatprep.subr.bf16.mxu0 %v266
    %365 = vmatpush1.bf16.msra.mxu0 %v265
    %366 = vmatprep.subr.bf16.mxu0 %v270
    %367 = vmatpush1.bf16.msra.mxu0 %v269
    %368 = vmatprep.subr.bf16.mxu0 %v274
    %369 = vmatpush1.bf16.msra.mxu0 %v273
    %370 = vmatprep.subr.bf16.mxu0 %v278
    %371 = vmatpush1.bf16.msra.mxu0 %v277
    %372 = vmatprep.subr.bf16.mxu0 %v282
    %373 = vmatpush1.bf16.msra.mxu0 %v281
    %374 = vmatprep.subr.bf16.mxu0 %v286
    %375 = vmatpush1.bf16.msra.mxu0 %v285
    %376 = vmatprep.subr.bf16.mxu0 0
    %377 = vmatpush1.bf16.msra.mxu0 0
    %378 = vmatprep.subr.bf16.mxu0 0
    %379 = vmatpush1.bf16.msra.mxu0 0
    %380 = vmatprep.subr.bf16.mxu0 0
    %381 = vmatpush1.bf16.msra.mxu0 0
    %382 = vmatprep.subr.bf16.mxu0 0
    %383 = vmatpush1.bf16.msra.mxu0 0
    %384 = vmatprep.subr.bf16.mxu0 0
    %385 = vmatpush1.bf16.msra.mxu0 0
    %386 = vmatprep.subr.bf16.mxu0 0
    %387 = vmatpush1.bf16.msra.mxu0 0
    %388 = vmatprep.subr.bf16.mxu0 0
    %389 = vmatpush1.bf16.msra.mxu0 0
    %390 = vmatprep.subr.bf16.mxu0 0
    %391 = vmatpush1.bf16.msra.mxu0 0
    %392 = vmatprep.mubr.bf16.mxu0 0
    %393 = vmatmul.mubr.bf16.gmra.mrb[0].mxu0 %v104
    %v394 = vpop.f32.mrb[0].mxu0
    %v395 = vadd.f32 %v150, %v394
    %v396 = vpop.f32.mrb[0].mxu0
    %v397 = vadd.f32 %v154, %v396
    %v398 = vpop.f32.mrb[0].mxu0
    %v399 = vpop.f32.mrb[0].mxu0
    %400 = vdwg.mxu0
    %v401 = vpack.c.bf16 %v354, %v354
    %v402 = vpack.c.bf16 %v356, %v356
    %v403 = vpack.c.bf16 %v395, %v395
    %v404 = vpack.c.bf16 %v397, %v397
    %v405 = vmul.bf16 %v401, 1009007652
    %v406 = vmul.bf16 %v402, 1009007652
    %v407 = vmul.bf16 %v403, 1009007652
    %v408 = vmul.bf16 %v404, 1009007652
    %v409 = vmax.bf16 %v401, %v405
    %v410 = vmax.bf16 %v402, %v406
    %v411 = vmax.bf16 %v403, %v407
    %v412 = vmax.bf16 %v404, %v408
    %v413 = vld [vmem:[#allocation9] sm:$0xff]
    %v414 = vld [vmem:[#allocation9 + $0x8] sm:$0xff]
    %v415 = vld [vmem:[#allocation9 + $0x10] sm:$0xff]
    %v416 = vld [vmem:[#allocation9 + $0x18] sm:$0xff]
    %v417 = vld [vmem:[#allocation9 + $0x20] sm:$0xff]
    %v418 = vld [vmem:[#allocation9 + $0x28] sm:$0xff]
    %v419 = vld [vmem:[#allocation9 + $0x30] sm:$0xff]
    %v420 = vld [vmem:[#allocation9 + $0x38] sm:$0xff]
    %v421 = vld [vmem:[#allocation9 + $0x40] sm:$0xff]
    %v422 = vld [vmem:[#allocation9 + $0x48] sm:$0xff]
    %v423 = vld [vmem:[#allocation9 + $0x50] sm:$0xff]
    %v424 = vld [vmem:[#allocation9 + $0x58] sm:$0xff]
    %v425 = vld [vmem:[#allocation9 + $0x60] sm:$0xff]
    %v426 = vld [vmem:[#allocation9 + $0x68] sm:$0xff]
    %v427 = vld [vmem:[#allocation9 + $0x70] sm:$0xff]
    %v428 = vld [vmem:[#allocation9 + $0x78] sm:$0xff]
    %v429 = vld [vmem:[#allocation9 + $0x80] sm:$0xff]
    %v430 = vld [vmem:[#allocation9 + $0x88] sm:$0xff]
    %v431 = vld [vmem:[#allocation9 + $0x90] sm:$0xff]
    %v432 = vld [vmem:[#allocation9 + $0x98] sm:$0xff]
    %v433 = vld [vmem:[#allocation9 + $0xa0] sm:$0xff]
    %v434 = vld [vmem:[#allocation9 + $0xa8] sm:$0xff]
    %v435 = vld [vmem:[#allocation9 + $0xb0] sm:$0xff]
    %v436 = vld [vmem:[#allocation9 + $0xb8] sm:$0xff]
    %v437 = vld [vmem:[#allocation9 + $0xc0] sm:$0xff]
    %v438 = vld [vmem:[#allocation9 + $0xc8] sm:$0xff]
    %v439 = vld [vmem:[#allocation9 + $0xd0] sm:$0xff]
    %v440 = vld [vmem:[#allocation9 + $0xd8] sm:$0xff]
    %v441 = vld [vmem:[#allocation9 + $0xe0] sm:$0xff]
    %v442 = vld [vmem:[#allocation9 + $0xe8] sm:$0xff]
    %v443 = vld [vmem:[#allocation9 + $0xf0] sm:$0xff]
    %v444 = vld [vmem:[#allocation9 + $0xf8] sm:$0xff]
    %v445 = vld [vmem:[#allocation9 + $0x100] sm:$0xff]
    %v446 = vld [vmem:[#allocation9 + $0x108] sm:$0xff]
    %v447 = vld [vmem:[#allocation9 + $0x110] sm:$0xff]
    %v448 = vld [vmem:[#allocation9 + $0x118] sm:$0xff]
    %v449 = vld [vmem:[#allocation9 + $0x120] sm:$0xff]
    %v450 = vld [vmem:[#allocation9 + $0x128] sm:$0xff]
    %v451 = vld [vmem:[#allocation9 + $0x130] sm:$0xff]
    %v452 = vld [vmem:[#allocation9 + $0x138] sm:$0xff]
    %v453 = vld [vmem:[#allocation9 + $0x140] sm:$0xff]
    %v454 = vld [vmem:[#allocation9 + $0x148] sm:$0xff]
    %v455 = vld [vmem:[#allocation9 + $0x150] sm:$0xff]
    %v456 = vld [vmem:[#allocation9 + $0x158] sm:$0xff]
    %v457 = vld [vmem:[#allocation9 + $0x160] sm:$0xff]
    %v458 = vld [vmem:[#allocation9 + $0x168] sm:$0xff]
    %v459 = vld [vmem:[#allocation9 + $0x170] sm:$0xff]
    %v460 = vld [vmem:[#allocation9 + $0x178] sm:$0xff]
    %v461 = vld [vmem:[#allocation9 + $0x180] sm:$0xff]
    %v462 = vld [vmem:[#allocation9 + $0x188] sm:$0xff]
    %v463 = vld [vmem:[#allocation9 + $0x190] sm:$0xff]
    %v464 = vld [vmem:[#allocation9 + $0x198] sm:$0xff]
    %v465 = vld [vmem:[#allocation9 + $0x1a0] sm:$0xff]
    %v466 = vld [vmem:[#allocation9 + $0x1a8] sm:$0xff]
    %v467 = vld [vmem:[#allocation9 + $0x1b0] sm:$0xff]
    %v468 = vld [vmem:[#allocation9 + $0x1b8] sm:$0xff]
    %v469 = vld [vmem:[#allocation9 + $0x1c0] sm:$0xff]
    %v470 = vld [vmem:[#allocation9 + $0x1c8] sm:$0xff]
    %v471 = vld [vmem:[#allocation9 + $0x1d0] sm:$0xff]
    %v472 = vld [vmem:[#allocation9 + $0x1d8] sm:$0xff]
    %v473 = vld [vmem:[#allocation9 + $0x1e0] sm:$0xff]
    %v474 = vld [vmem:[#allocation9 + $0x1e8] sm:$0xff]
    %v475 = vld [vmem:[#allocation9 + $0x1f0] sm:$0xff]
    %v476 = vld [vmem:[#allocation9 + $0x1f8] sm:$0xff]
    %v477 = vld [vmem:[#allocation9 + $0x200] sm:$0xff]
    %v478 = vld [vmem:[#allocation9 + $0x208] sm:$0xff]
    %v479 = vld [vmem:[#allocation9 + $0x210] sm:$0xff]
    %v480 = vld [vmem:[#allocation9 + $0x218] sm:$0xff]
    %v481 = vld [vmem:[#allocation9 + $0x220] sm:$0xff]
    %v482 = vld [vmem:[#allocation9 + $0x228] sm:$0xff]
    %v483 = vld [vmem:[#allocation9 + $0x230] sm:$0xff]
    %v484 = vld [vmem:[#allocation9 + $0x238] sm:$0xff]
    %v485 = vld [vmem:[#allocation9 + $0x240] sm:$0xff]
    %v486 = vld [vmem:[#allocation9 + $0x248] sm:$0xff]
    %v487 = vld [vmem:[#allocation9 + $0x250] sm:$0xff]
    %v488 = vld [vmem:[#allocation9 + $0x258] sm:$0xff]
    %v489 = vld [vmem:[#allocation9 + $0x260] sm:$0xff]
    %v490 = vld [vmem:[#allocation9 + $0x268] sm:$0xff]
    %v491 = vld [vmem:[#allocation9 + $0x270] sm:$0xff]
    %v492 = vld [vmem:[#allocation9 + $0x278] sm:$0xff]
    %v493 = vld [vmem:[#allocation9 + $0x280] sm:$0xff]
    %v494 = vld [vmem:[#allocation9 + $0x288] sm:$0xff]
    %v495 = vld [vmem:[#allocation9 + $0x290] sm:$0xff]
    %v496 = vld [vmem:[#allocation9 + $0x298] sm:$0xff]
    %v497 = vld [vmem:[#allocation9 + $0x2a0] sm:$0xff]
    %v498 = vld [vmem:[#allocation9 + $0x2a8] sm:$0xff]
    %v499 = vld [vmem:[#allocation9 + $0x2b0] sm:$0xff]
    %v500 = vld [vmem:[#allocation9 + $0x2b8] sm:$0xff]
    %v501 = vld [vmem:[#allocation9 + $0x2c0] sm:$0xff]
    %v502 = vld [vmem:[#allocation9 + $0x2c8] sm:$0xff]
    %v503 = vld [vmem:[#allocation9 + $0x2d0] sm:$0xff]
    %v504 = vld [vmem:[#allocation9 + $0x2d8] sm:$0xff]
    %v505 = vld [vmem:[#allocation9 + $0x2e0] sm:$0xff]
    %v506 = vld [vmem:[#allocation9 + $0x2e8] sm:$0xff]
    %v507 = vld [vmem:[#allocation9 + $0x2f0] sm:$0xff]
    %v508 = vld [vmem:[#allocation9 + $0x2f8] sm:$0xff]
    %v509 = vld [vmem:[#allocation9 + $0x300] sm:$0xff]
    %v510 = vld [vmem:[#allocation9 + $0x308] sm:$0xff]
    %v511 = vld [vmem:[#allocation9 + $0x310] sm:$0xff]
    %v512 = vld [vmem:[#allocation9 + $0x318] sm:$0xff]
    %v513 = vld [vmem:[#allocation9 + $0x320] sm:$0xff]
    %v514 = vld [vmem:[#allocation9 + $0x328] sm:$0xff]
    %v515 = vld [vmem:[#allocation9 + $0x330] sm:$0xff]
    %v516 = vld [vmem:[#allocation9 + $0x338] sm:$0xff]
    %v517 = vld [vmem:[#allocation9 + $0x340] sm:$0xff]
    %v518 = vld [vmem:[#allocation9 + $0x348] sm:$0xff]
    %v519 = vld [vmem:[#allocation9 + $0x350] sm:$0xff]
    %v520 = vld [vmem:[#allocation9 + $0x358] sm:$0xff]
    %v521 = vld [vmem:[#allocation9 + $0x360] sm:$0xff]
    %v522 = vld [vmem:[#allocation9 + $0x368] sm:$0xff]
    %v523 = vld [vmem:[#allocation9 + $0x370] sm:$0xff]
    %v524 = vld [vmem:[#allocation9 + $0x378] sm:$0xff]
    %v525 = vld [vmem:[#allocation9 + $0x380] sm:$0xff]
    %v526 = vld [vmem:[#allocation9 + $0x388] sm:$0xff]
    %v527 = vld [vmem:[#allocation9 + $0x390] sm:$0xff]
    %v528 = vld [vmem:[#allocation9 + $0x398] sm:$0xff]
    %v529 = vld [vmem:[#allocation9 + $0x3a0] sm:$0xff]
    %v530 = vld [vmem:[#allocation9 + $0x3a8] sm:$0xff]
    %v531 = vld [vmem:[#allocation9 + $0x3b0] sm:$0xff]
    %v532 = vld [vmem:[#allocation9 + $0x3b8] sm:$0xff]
    %v533 = vld [vmem:[#allocation9 + $0x3c0] sm:$0xff]
    %v534 = vld [vmem:[#allocation9 + $0x3c8] sm:$0xff]
    %v535 = vld [vmem:[#allocation9 + $0x3d0] sm:$0xff]
    %v536 = vld [vmem:[#allocation9 + $0x3d8] sm:$0xff]
    %v537 = vld [vmem:[#allocation9 + $0x3e0] sm:$0xff]
    %v538 = vld [vmem:[#allocation9 + $0x3e8] sm:$0xff]
    %v539 = vld [vmem:[#allocation9 + $0x3f0] sm:$0xff]
    %v540 = vld [vmem:[#allocation9 + $0x3f8] sm:$0xff]
    %v541 = vld [vmem:[%s5] sm:$0xf]
    %v543 = vlaneseq
    %v544 = vshrl.u32 %v543, 7
    %v545 = vsub.s32 0, %v544
    %v546 = vrot.slane %v541, %v545
    %v547 = vlaneseq
    %v548 = vshrl.u32 %v547, 7
    %v549 = vsub.s32 1, %v548
    %v550 = vrot.slane %v541, %v549
    %v551 = vlaneseq
    %v552 = vshrl.u32 %v551, 7
    %v553 = vsub.s32 2, %v552
    %v554 = vrot.slane %v541, %v553
    %v555 = vlaneseq
    %v556 = vshrl.u32 %v555, 7
    %v557 = vsub.s32 3, %v556
    %v558 = vrot.slane %v541, %v557
    %v691 = vunpack.c.l.b16 %v413
    %v692 = vunpack.c.h.b16 %v413
    %v693 = vunpack.c.l.b16 %v414
    %v694 = vunpack.c.h.b16 %v414
    %v695 = vunpack.c.l.b16 %v415
    %v696 = vunpack.c.h.b16 %v415
    %v697 = vunpack.c.l.b16 %v416
    %v698 = vunpack.c.h.b16 %v416
    %v699 = vunpack.c.l.b16 %v417
    %v700 = vunpack.c.h.b16 %v417
    %v701 = vunpack.c.l.b16 %v418
    %v702 = vunpack.c.h.b16 %v418
    %v703 = vunpack.c.l.b16 %v419
    %v704 = vunpack.c.h.b16 %v419
    %v705 = vunpack.c.l.b16 %v420
    %v706 = vunpack.c.h.b16 %v420
    %v707 = vunpack.c.l.b16 %v421
    %v708 = vunpack.c.h.b16 %v421
    %v709 = vunpack.c.l.b16 %v422
    %v710 = vunpack.c.h.b16 %v422
    %v711 = vunpack.c.l.b16 %v423
    %v712 = vunpack.c.h.b16 %v423
    %v713 = vunpack.c.l.b16 %v424
    %v714 = vunpack.c.h.b16 %v424
    %v715 = vunpack.c.l.b16 %v425
    %v716 = vunpack.c.h.b16 %v425
    %v717 = vunpack.c.l.b16 %v426
    %v718 = vunpack.c.h.b16 %v426
    %v719 = vunpack.c.l.b16 %v427
    %v720 = vunpack.c.h.b16 %v427
    %v721 = vunpack.c.l.b16 %v428
    %v722 = vunpack.c.h.b16 %v428
    %v723 = vunpack.c.l.b16 %v429
    %v724 = vunpack.c.h.b16 %v429
    %v725 = vunpack.c.l.b16 %v430
    %v726 = vunpack.c.h.b16 %v430
    %v727 = vunpack.c.l.b16 %v431
    %v728 = vunpack.c.h.b16 %v431
    %v729 = vunpack.c.l.b16 %v432
    %v730 = vunpack.c.h.b16 %v432
    %v731 = vunpack.c.l.b16 %v433
    %v732 = vunpack.c.h.b16 %v433
    %v733 = vunpack.c.l.b16 %v434
    %v734 = vunpack.c.h.b16 %v434
    %v735 = vunpack.c.l.b16 %v435
    %v736 = vunpack.c.h.b16 %v435
    %v737 = vunpack.c.l.b16 %v436
    %v738 = vunpack.c.h.b16 %v436
    %v739 = vunpack.c.l.b16 %v437
    %v740 = vunpack.c.h.b16 %v437
    %v741 = vunpack.c.l.b16 %v438
    %v742 = vunpack.c.h.b16 %v438
    %v743 = vunpack.c.l.b16 %v439
    %v744 = vunpack.c.h.b16 %v439
    %v745 = vunpack.c.l.b16 %v440
    %v746 = vunpack.c.h.b16 %v440
    %v747 = vunpack.c.l.b16 %v441
    %v748 = vunpack.c.h.b16 %v441
    %v749 = vunpack.c.l.b16 %v442
    %v750 = vunpack.c.h.b16 %v442
    %v751 = vunpack.c.l.b16 %v443
    %v752 = vunpack.c.h.b16 %v443
    %v753 = vunpack.c.l.b16 %v444
    %v754 = vunpack.c.h.b16 %v444
    %v755 = vunpack.c.l.b16 %v445
    %v756 = vunpack.c.h.b16 %v445
    %v757 = vunpack.c.l.b16 %v446
    %v758 = vunpack.c.h.b16 %v446
    %v759 = vunpack.c.l.b16 %v447
    %v760 = vunpack.c.h.b16 %v447
    %v761 = vunpack.c.l.b16 %v448
    %v762 = vunpack.c.h.b16 %v448
    %v763 = vunpack.c.l.b16 %v449
    %v764 = vunpack.c.h.b16 %v449
    %v765 = vunpack.c.l.b16 %v450
    %v766 = vunpack.c.h.b16 %v450
    %v767 = vunpack.c.l.b16 %v451
    %v768 = vunpack.c.h.b16 %v451
    %v769 = vunpack.c.l.b16 %v452
    %v770 = vunpack.c.h.b16 %v452
    %v771 = vunpack.c.l.b16 %v453
    %v772 = vunpack.c.h.b16 %v453
    %v773 = vunpack.c.l.b16 %v454
    %v774 = vunpack.c.h.b16 %v454
    %v775 = vunpack.c.l.b16 %v455
    %v776 = vunpack.c.h.b16 %v455
    %v777 = vunpack.c.l.b16 %v456
    %v778 = vunpack.c.h.b16 %v456
    %v779 = vunpack.c.l.b16 %v457
    %v780 = vunpack.c.h.b16 %v457
    %v781 = vunpack.c.l.b16 %v458
    %v782 = vunpack.c.h.b16 %v458
    %v783 = vunpack.c.l.b16 %v459
    %v784 = vunpack.c.h.b16 %v459
    %v785 = vunpack.c.l.b16 %v460
    %v786 = vunpack.c.h.b16 %v460
    %v787 = vunpack.c.l.b16 %v461
    %v788 = vunpack.c.h.b16 %v461
    %v789 = vunpack.c.l.b16 %v462
    %v790 = vunpack.c.h.b16 %v462
    %v791 = vunpack.c.l.b16 %v463
    %v792 = vunpack.c.h.b16 %v463
    %v793 = vunpack.c.l.b16 %v464
    %v794 = vunpack.c.h.b16 %v464
    %v795 = vunpack.c.l.b16 %v465
    %v796 = vunpack.c.h.b16 %v465
    %v797 = vunpack.c.l.b16 %v466
    %v798 = vunpack.c.h.b16 %v466
    %v799 = vunpack.c.l.b16 %v467
    %v800 = vunpack.c.h.b16 %v467
    %v801 = vunpack.c.l.b16 %v468
    %v802 = vunpack.c.h.b16 %v468
    %v803 = vunpack.c.l.b16 %v469
    %v804 = vunpack.c.h.b16 %v469
    %v805 = vunpack.c.l.b16 %v470
    %v806 = vunpack.c.h.b16 %v470
    %v807 = vunpack.c.l.b16 %v471
    %v808 = vunpack.c.h.b16 %v471
    %v809 = vunpack.c.l.b16 %v472
    %v810 = vunpack.c.h.b16 %v472
    %v811 = vunpack.c.l.b16 %v473
    %v812 = vunpack.c.h.b16 %v473
    %v813 = vunpack.c.l.b16 %v474
    %v814 = vunpack.c.h.b16 %v474
    %v815 = vunpack.c.l.b16 %v475
    %v816 = vunpack.c.h.b16 %v475
    %v817 = vunpack.c.l.b16 %v476
    %v818 = vunpack.c.h.b16 %v476
    %v819 = vunpack.c.l.b16 %v477
    %v820 = vunpack.c.h.b16 %v477
    %v821 = vunpack.c.l.b16 %v478
    %v822 = vunpack.c.h.b16 %v478
    %v823 = vunpack.c.l.b16 %v479
    %v824 = vunpack.c.h.b16 %v479
    %v825 = vunpack.c.l.b16 %v480
    %v826 = vunpack.c.h.b16 %v480
    %v827 = vunpack.c.l.b16 %v481
    %v828 = vunpack.c.h.b16 %v481
    %v829 = vunpack.c.l.b16 %v482
    %v830 = vunpack.c.h.b16 %v482
    %v831 = vunpack.c.l.b16 %v483
    %v832 = vunpack.c.h.b16 %v483
    %v833 = vunpack.c.l.b16 %v484
    %v834 = vunpack.c.h.b16 %v484
    %v835 = vunpack.c.l.b16 %v485
    %v836 = vunpack.c.h.b16 %v485
    %v837 = vunpack.c.l.b16 %v486
    %v838 = vunpack.c.h.b16 %v486
    %v839 = vunpack.c.l.b16 %v487
    %v840 = vunpack.c.h.b16 %v487
    %v841 = vunpack.c.l.b16 %v488
    %v842 = vunpack.c.h.b16 %v488
    %v843 = vunpack.c.l.b16 %v489
    %v844 = vunpack.c.h.b16 %v489
    %v845 = vunpack.c.l.b16 %v490
    %v846 = vunpack.c.h.b16 %v490
    %v847 = vunpack.c.l.b16 %v491
    %v848 = vunpack.c.h.b16 %v491
    %v849 = vunpack.c.l.b16 %v492
    %v850 = vunpack.c.h.b16 %v492
    %v851 = vunpack.c.l.b16 %v493
    %v852 = vunpack.c.h.b16 %v493
    %v853 = vunpack.c.l.b16 %v494
    %v854 = vunpack.c.h.b16 %v494
    %v855 = vunpack.c.l.b16 %v495
    %v856 = vunpack.c.h.b16 %v495
    %v857 = vunpack.c.l.b16 %v496
    %v858 = vunpack.c.h.b16 %v496
    %v859 = vunpack.c.l.b16 %v497
    %v860 = vunpack.c.h.b16 %v497
    %v861 = vunpack.c.l.b16 %v498
    %v862 = vunpack.c.h.b16 %v498
    %v863 = vunpack.c.l.b16 %v499
    %v864 = vunpack.c.h.b16 %v499
    %v865 = vunpack.c.l.b16 %v500
    %v866 = vunpack.c.h.b16 %v500
    %v867 = vunpack.c.l.b16 %v501
    %v868 = vunpack.c.h.b16 %v501
    %v869 = vunpack.c.l.b16 %v502
    %v870 = vunpack.c.h.b16 %v502
    %v871 = vunpack.c.l.b16 %v503
    %v872 = vunpack.c.h.b16 %v503
    %v873 = vunpack.c.l.b16 %v504
    %v874 = vunpack.c.h.b16 %v504
    %v875 = vunpack.c.l.b16 %v505
    %v876 = vunpack.c.h.b16 %v505
    %v877 = vunpack.c.l.b16 %v506
    %v878 = vunpack.c.h.b16 %v506
    %v879 = vunpack.c.l.b16 %v507
    %v880 = vunpack.c.h.b16 %v507
    %v881 = vunpack.c.l.b16 %v508
    %v882 = vunpack.c.h.b16 %v508
    %v883 = vunpack.c.l.b16 %v509
    %v884 = vunpack.c.h.b16 %v509
    %v885 = vunpack.c.l.b16 %v510
    %v886 = vunpack.c.h.b16 %v510
    %v887 = vunpack.c.l.b16 %v511
    %v888 = vunpack.c.h.b16 %v511
    %v889 = vunpack.c.l.b16 %v512
    %v890 = vunpack.c.h.b16 %v512
    %v891 = vunpack.c.l.b16 %v513
    %v892 = vunpack.c.h.b16 %v513
    %v893 = vunpack.c.l.b16 %v514
    %v894 = vunpack.c.h.b16 %v514
    %v895 = vunpack.c.l.b16 %v515
    %v896 = vunpack.c.h.b16 %v515
    %v897 = vunpack.c.l.b16 %v516
    %v898 = vunpack.c.h.b16 %v516
    %v899 = vunpack.c.l.b16 %v517
    %v900 = vunpack.c.h.b16 %v517
    %v901 = vunpack.c.l.b16 %v518
    %v902 = vunpack.c.h.b16 %v518
    %v903 = vunpack.c.l.b16 %v519
    %v904 = vunpack.c.h.b16 %v519
    %v905 = vunpack.c.l.b16 %v520
    %v906 = vunpack.c.h.b16 %v520
    %v907 = vunpack.c.l.b16 %v521
    %v908 = vunpack.c.h.b16 %v521
    %v909 = vunpack.c.l.b16 %v522
    %v910 = vunpack.c.h.b16 %v522
    %v911 = vunpack.c.l.b16 %v523
    %v912 = vunpack.c.h.b16 %v523
    %v913 = vunpack.c.l.b16 %v524
    %v914 = vunpack.c.h.b16 %v524
    %v915 = vunpack.c.l.b16 %v525
    %v916 = vunpack.c.h.b16 %v525
    %v917 = vunpack.c.l.b16 %v526
    %v918 = vunpack.c.h.b16 %v526
    %v919 = vunpack.c.l.b16 %v527
    %v920 = vunpack.c.h.b16 %v527
    %v921 = vunpack.c.l.b16 %v528
    %v922 = vunpack.c.h.b16 %v528
    %v923 = vunpack.c.l.b16 %v529
    %v924 = vunpack.c.h.b16 %v529
    %v925 = vunpack.c.l.b16 %v530
    %v926 = vunpack.c.h.b16 %v530
    %v927 = vunpack.c.l.b16 %v531
    %v928 = vunpack.c.h.b16 %v531
    %v929 = vunpack.c.l.b16 %v532
    %v930 = vunpack.c.h.b16 %v532
    %v931 = vunpack.c.l.b16 %v533
    %v932 = vunpack.c.h.b16 %v533
    %v933 = vunpack.c.l.b16 %v534
    %v934 = vunpack.c.h.b16 %v534
    %v935 = vunpack.c.l.b16 %v535
    %v936 = vunpack.c.h.b16 %v535
    %v937 = vunpack.c.l.b16 %v536
    %v938 = vunpack.c.h.b16 %v536
    %v939 = vunpack.c.l.b16 %v537
    %v940 = vunpack.c.h.b16 %v537
    %v941 = vunpack.c.l.b16 %v538
    %v942 = vunpack.c.h.b16 %v538
    %v943 = vunpack.c.l.b16 %v539
    %v944 = vunpack.c.h.b16 %v539
    %v945 = vunpack.c.l.b16 %v540
    %v946 = vunpack.c.h.b16 %v540
    %v947 = vpack.c.b16 %v695, %v691
    %v948 = vpack.c.b16 %v696, %v692
    %v949 = vpack.c.b16 %v697, %v693
    %v950 = vpack.c.b16 %v698, %v694
    %v951 = vpack.c.b16 %v703, %v699
    %v952 = vpack.c.b16 %v704, %v700
    %v953 = vpack.c.b16 %v705, %v701
    %v954 = vpack.c.b16 %v706, %v702
    %v955 = vpack.c.b16 %v711, %v707
    %v956 = vpack.c.b16 %v712, %v708
    %v957 = vpack.c.b16 %v713, %v709
    %v958 = vpack.c.b16 %v714, %v710
    %v959 = vpack.c.b16 %v719, %v715
    %v960 = vpack.c.b16 %v720, %v716
    %v961 = vpack.c.b16 %v721, %v717
    %v962 = vpack.c.b16 %v722, %v718
    %v963 = vpack.c.b16 %v727, %v723
    %v964 = vpack.c.b16 %v728, %v724
    %v965 = vpack.c.b16 %v729, %v725
    %v966 = vpack.c.b16 %v730, %v726
    %v967 = vpack.c.b16 %v735, %v731
    %v968 = vpack.c.b16 %v736, %v732
    %v969 = vpack.c.b16 %v737, %v733
    %v970 = vpack.c.b16 %v738, %v734
    %v971 = vpack.c.b16 %v743, %v739
    %v972 = vpack.c.b16 %v744, %v740
    %v973 = vpack.c.b16 %v745, %v741
    %v974 = vpack.c.b16 %v746, %v742
    %v975 = vpack.c.b16 %v751, %v747
    %v976 = vpack.c.b16 %v752, %v748
    %v977 = vpack.c.b16 %v753, %v749
    %v978 = vpack.c.b16 %v754, %v750
    %v979 = vpack.c.b16 %v759, %v755
    %v980 = vpack.c.b16 %v760, %v756
    %v981 = vpack.c.b16 %v761, %v757
    %v982 = vpack.c.b16 %v762, %v758
    %v983 = vpack.c.b16 %v767, %v763
    %v984 = vpack.c.b16 %v768, %v764
    %v985 = vpack.c.b16 %v769, %v765
    %v986 = vpack.c.b16 %v770, %v766
    %v987 = vpack.c.b16 %v775, %v771
    %v988 = vpack.c.b16 %v776, %v772
    %v989 = vpack.c.b16 %v777, %v773
    %v990 = vpack.c.b16 %v778, %v774
    %v991 = vpack.c.b16 %v783, %v779
    %v992 = vpack.c.b16 %v784, %v780
    %v993 = vpack.c.b16 %v785, %v781
    %v994 = vpack.c.b16 %v786, %v782
    %v995 = vpack.c.b16 %v791, %v787
    %v996 = vpack.c.b16 %v792, %v788
    %v997 = vpack.c.b16 %v793, %v789
    %v998 = vpack.c.b16 %v794, %v790
    %v999 = vpack.c.b16 %v799, %v795
    %v1000 = vpack.c.b16 %v800, %v796
    %v1001 = vpack.c.b16 %v801, %v797
    %v1002 = vpack.c.b16 %v802, %v798
    %v1003 = vpack.c.b16 %v807, %v803
    %v1004 = vpack.c.b16 %v808, %v804
    %v1005 = vpack.c.b16 %v809, %v805
    %v1006 = vpack.c.b16 %v810, %v806
    %v1007 = vpack.c.b16 %v815, %v811
    %v1008 = vpack.c.b16 %v816, %v812
    %v1009 = vpack.c.b16 %v817, %v813
    %v1010 = vpack.c.b16 %v818, %v814
    %v1011 = vpack.c.b16 %v823, %v819
    %v1012 = vpack.c.b16 %v824, %v820
    %v1013 = vpack.c.b16 %v825, %v821
    %v1014 = vpack.c.b16 %v826, %v822
    %v1015 = vpack.c.b16 %v831, %v827
    %v1016 = vpack.c.b16 %v832, %v828
    %v1017 = vpack.c.b16 %v833, %v829
    %v1018 = vpack.c.b16 %v834, %v830
    %v1019 = vpack.c.b16 %v839, %v835
    %v1020 = vpack.c.b16 %v840, %v836
    %v1021 = vpack.c.b16 %v841, %v837
    %v1022 = vpack.c.b16 %v842, %v838
    %v1023 = vpack.c.b16 %v847, %v843
    %v1024 = vpack.c.b16 %v848, %v844
    %v1025 = vpack.c.b16 %v849, %v845
    %v1026 = vpack.c.b16 %v850, %v846
    %v1027 = vpack.c.b16 %v855, %v851
    %v1028 = vpack.c.b16 %v856, %v852
    %v1029 = vpack.c.b16 %v857, %v853
    %v1030 = vpack.c.b16 %v858, %v854
    %v1031 = vpack.c.b16 %v863, %v859
    %v1032 = vpack.c.b16 %v864, %v860
    %v1033 = vpack.c.b16 %v865, %v861
    %v1034 = vpack.c.b16 %v866, %v862
    %v1035 = vpack.c.b16 %v871, %v867
    %v1036 = vpack.c.b16 %v872, %v868
    %v1037 = vpack.c.b16 %v873, %v869
    %v1038 = vpack.c.b16 %v874, %v870
    %v1039 = vpack.c.b16 %v879, %v875
    %v1040 = vpack.c.b16 %v880, %v876
    %v1041 = vpack.c.b16 %v881, %v877
    %v1042 = vpack.c.b16 %v882, %v878
    %v1043 = vpack.c.b16 %v887, %v883
    %v1044 = vpack.c.b16 %v888, %v884
    %v1045 = vpack.c.b16 %v889, %v885
    %v1046 = vpack.c.b16 %v890, %v886
    %v1047 = vpack.c.b16 %v895, %v891
    %v1048 = vpack.c.b16 %v896, %v892
    %v1049 = vpack.c.b16 %v897, %v893
    %v1050 = vpack.c.b16 %v898, %v894
    %v1051 = vpack.c.b16 %v903, %v899
    %v1052 = vpack.c.b16 %v904, %v900
    %v1053 = vpack.c.b16 %v905, %v901
    %v1054 = vpack.c.b16 %v906, %v902
    %v1055 = vpack.c.b16 %v911, %v907
    %v1056 = vpack.c.b16 %v912, %v908
    %v1057 = vpack.c.b16 %v913, %v909
    %v1058 = vpack.c.b16 %v914, %v910
    %v1059 = vpack.c.b16 %v919, %v915
    %v1060 = vpack.c.b16 %v920, %v916
    %v1061 = vpack.c.b16 %v921, %v917
    %v1062 = vpack.c.b16 %v922, %v918
    %v1063 = vpack.c.b16 %v927, %v923
    %v1064 = vpack.c.b16 %v928, %v924
    %v1065 = vpack.c.b16 %v929, %v925
    %v1066 = vpack.c.b16 %v930, %v926
    %v1067 = vpack.c.b16 %v935, %v931
    %v1068 = vpack.c.b16 %v936, %v932
    %v1069 = vpack.c.b16 %v937, %v933
    %v1070 = vpack.c.b16 %v938, %v934
    %v1071 = vpack.c.b16 %v943, %v939
    %v1072 = vpack.c.b16 %v944, %v940
    %v1073 = vpack.c.b16 %v945, %v941
    %v1074 = vpack.c.b16 %v946, %v942
    %1203 = vmatprep.subr.bf16.mxu0 %v948
    %1204 = vmatpush1.bf16.msra.mxu0 %v947
    %1205 = vmatprep.subr.bf16.mxu0 %v952
    %1206 = vmatpush1.bf16.msra.mxu0 %v951
    %1207 = vmatprep.subr.bf16.mxu0 %v956
    %1208 = vmatpush1.bf16.msra.mxu0 %v955
    %1209 = vmatprep.subr.bf16.mxu0 %v960
    %1210 = vmatpush1.bf16.msra.mxu0 %v959
    %1211 = vmatprep.subr.bf16.mxu0 %v964
    %1212 = vmatpush1.bf16.msra.mxu0 %v963
    %1213 = vmatprep.subr.bf16.mxu0 %v968
    %1214 = vmatpush1.bf16.msra.mxu0 %v967
    %1215 = vmatprep.subr.bf16.mxu0 %v972
    %1216 = vmatpush1.bf16.msra.mxu0 %v971
    %1217 = vmatprep.subr.bf16.mxu0 %v976
    %1218 = vmatpush1.bf16.msra.mxu0 %v975
    %1219 = vmatprep.subr.bf16.mxu0 %v980
    %1220 = vmatpush1.bf16.msra.mxu0 %v979
    %1221 = vmatprep.subr.bf16.mxu0 %v984
    %1222 = vmatpush1.bf16.msra.mxu0 %v983
    %1223 = vmatprep.subr.bf16.mxu0 %v988
    %1224 = vmatpush1.bf16.msra.mxu0 %v987
    %1225 = vmatprep.subr.bf16.mxu0 %v992
    %1226 = vmatpush1.bf16.msra.mxu0 %v991
    %1227 = vmatprep.subr.bf16.mxu0 %v996
    %1228 = vmatpush1.bf16.msra.mxu0 %v995
    %1229 = vmatprep.subr.bf16.mxu0 %v1000
    %1230 = vmatpush1.bf16.msra.mxu0 %v999
    %1231 = vmatprep.subr.bf16.mxu0 %v1004
    %1232 = vmatpush1.bf16.msra.mxu0 %v1003
    %1233 = vmatprep.subr.bf16.mxu0 %v1008
    %1234 = vmatpush1.bf16.msra.mxu0 %v1007
    %1235 = vmatprep.mubr.bf16.mxu0 %v410
    %1236 = vmatmul.mubr.bf16.gmra.mrb[0].mxu0 %v409
    %v1237 = vpop.f32.mrb[0].mxu0
    %v1238 = vadd.f32 %v546, %v1237
    %v1239 = vpop.f32.mrb[0].mxu0
    %v1240 = vadd.f32 %v550, %v1239
    %v1241 = vpop.f32.mrb[0].mxu0
    %v1242 = vpop.f32.mrb[0].mxu0
    %1243 = vdwg.mxu0
    %1244 = vmatprep.subr.bf16.mxu0 %v1012
    %1245 = vmatpush1.bf16.msra.mxu0 %v1011
    %1246 = vmatprep.subr.bf16.mxu0 %v1016
    %1247 = vmatpush1.bf16.msra.mxu0 %v1015
    %1248 = vmatprep.subr.bf16.mxu0 %v1020
    %1249 = vmatpush1.bf16.msra.mxu0 %v1019
    %1250 = vmatprep.subr.bf16.mxu0 %v1024
    %1251 = vmatpush1.bf16.msra.mxu0 %v1023
    %1252 = vmatprep.subr.bf16.mxu0 %v1028
    %1253 = vmatpush1.bf16.msra.mxu0 %v1027
    %1254 = vmatprep.subr.bf16.mxu0 %v1032
    %1255 = vmatpush1.bf16.msra.mxu0 %v1031
    %1256 = vmatprep.subr.bf16.mxu0 %v1036
    %1257 = vmatpush1.bf16.msra.mxu0 %v1035
    %1258 = vmatprep.subr.bf16.mxu0 %v1040
    %1259 = vmatpush1.bf16.msra.mxu0 %v1039
    %1260 = vmatprep.subr.bf16.mxu0 %v1044
    %1261 = vmatpush1.bf16.msra.mxu0 %v1043
    %1262 = vmatprep.subr.bf16.mxu0 %v1048
    %1263 = vmatpush1.bf16.msra.mxu0 %v1047
    %1264 = vmatprep.subr.bf16.mxu0 %v1052
    %1265 = vmatpush1.bf16.msra.mxu0 %v1051
    %1266 = vmatprep.subr.bf16.mxu0 %v1056
    %1267 = vmatpush1.bf16.msra.mxu0 %v1055
    %1268 = vmatprep.subr.bf16.mxu0 %v1060
    %1269 = vmatpush1.bf16.msra.mxu0 %v1059
    %1270 = vmatprep.subr.bf16.mxu0 %v1064
    %1271 = vmatpush1.bf16.msra.mxu0 %v1063
    %1272 = vmatprep.subr.bf16.mxu0 %v1068
    %1273 = vmatpush1.bf16.msra.mxu0 %v1067
    %1274 = vmatprep.subr.bf16.mxu0 %v1072
    %1275 = vmatpush1.bf16.msra.mxu0 %v1071
    %1276 = vmatprep.mubr.bf16.mxu0 %v412
    %1277 = vmatmul.mubr.bf16.gmra.mrb[0].mxu0 %v411
    %v1278 = vpop.f32.mrb[0].mxu0
    %v1279 = vadd.f32 %v1238, %v1278
    %v1280 = vpop.f32.mrb[0].mxu0
    %v1281 = vadd.f32 %v1240, %v1280
    %v1282 = vpop.f32.mrb[0].mxu0
    %v1283 = vpop.f32.mrb[0].mxu0
    %1284 = vdwg.mxu0
    %1285 = vmatprep.subr.bf16.mxu0 %v950
    %1286 = vmatpush1.bf16.msra.mxu0 %v949
    %1287 = vmatprep.subr.bf16.mxu0 %v954
    %1288 = vmatpush1.bf16.msra.mxu0 %v953
    %1289 = vmatprep.subr.bf16.mxu0 %v958
    %1290 = vmatpush1.bf16.msra.mxu0 %v957
    %1291 = vmatprep.subr.bf16.mxu0 %v962
    %1292 = vmatpush1.bf16.msra.mxu0 %v961
    %1293 = vmatprep.subr.bf16.mxu0 %v966
    %1294 = vmatpush1.bf16.msra.mxu0 %v965
    %1295 = vmatprep.subr.bf16.mxu0 %v970
    %1296 = vmatpush1.bf16.msra.mxu0 %v969
    %1297 = vmatprep.subr.bf16.mxu0 %v974
    %1298 = vmatpush1.bf16.msra.mxu0 %v973
    %1299 = vmatprep.subr.bf16.mxu0 %v978
    %1300 = vmatpush1.bf16.msra.mxu0 %v977
    %1301 = vmatprep.subr.bf16.mxu0 %v982
    %1302 = vmatpush1.bf16.msra.mxu0 %v981
    %1303 = vmatprep.subr.bf16.mxu0 %v986
    %1304 = vmatpush1.bf16.msra.mxu0 %v985
    %1305 = vmatprep.subr.bf16.mxu0 %v990
    %1306 = vmatpush1.bf16.msra.mxu0 %v989
    %1307 = vmatprep.subr.bf16.mxu0 %v994
    %1308 = vmatpush1.bf16.msra.mxu0 %v993
    %1309 = vmatprep.subr.bf16.mxu0 %v998
    %1310 = vmatpush1.bf16.msra.mxu0 %v997
    %1311 = vmatprep.subr.bf16.mxu0 %v1002
    %1312 = vmatpush1.bf16.msra.mxu0 %v1001
    %1313 = vmatprep.subr.bf16.mxu0 %v1006
    %1314 = vmatpush1.bf16.msra.mxu0 %v1005
    %1315 = vmatprep.subr.bf16.mxu0 %v1010
    %1316 = vmatpush1.bf16.msra.mxu0 %v1009
    %1317 = vmatprep.mubr.bf16.mxu0 %v410
    %1318 = vmatmul.mubr.bf16.gmra.mrb[0].mxu0 %v409
    %v1319 = vpop.f32.mrb[0].mxu0
    %v1320 = vadd.f32 %v554, %v1319
    %v1321 = vpop.f32.mrb[0].mxu0
    %v1322 = vadd.f32 %v558, %v1321
    %v1323 = vpop.f32.mrb[0].mxu0
    %v1324 = vpop.f32.mrb[0].mxu0
    %1325 = vdwg.mxu0
    %1326 = vmatprep.subr.bf16.mxu0 %v1014
    %1327 = vmatpush1.bf16.msra.mxu0 %v1013
    %1328 = vmatprep.subr.bf16.mxu0 %v1018
    %1329 = vmatpush1.bf16.msra.mxu0 %v1017
    %1330 = vmatprep.subr.bf16.mxu0 %v1022
    %1331 = vmatpush1.bf16.msra.mxu0 %v1021
    %1332 = vmatprep.subr.bf16.mxu0 %v1026
    %1333 = vmatpush1.bf16.msra.mxu0 %v1025
    %1334 = vmatprep.subr.bf16.mxu0 %v1030
    %1335 = vmatpush1.bf16.msra.mxu0 %v1029
    %1336 = vmatprep.subr.bf16.mxu0 %v1034
    %1337 = vmatpush1.bf16.msra.mxu0 %v1033
    %1338 = vmatprep.subr.bf16.mxu0 %v1038
    %1339 = vmatpush1.bf16.msra.mxu0 %v1037
    %1340 = vmatprep.subr.bf16.mxu0 %v1042
    %1341 = vmatpush1.bf16.msra.mxu0 %v1041
    %1342 = vmatprep.subr.bf16.mxu0 %v1046
    %1343 = vmatpush1.bf16.msra.mxu0 %v1045
    %1344 = vmatprep.subr.bf16.mxu0 %v1050
    %1345 = vmatpush1.bf16.msra.mxu0 %v1049
    %1346 = vmatprep.subr.bf16.mxu0 %v1054
    %1347 = vmatpush1.bf16.msra.mxu0 %v1053
    %1348 = vmatprep.subr.bf16.mxu0 %v1058
    %1349 = vmatpush1.bf16.msra.mxu0 %v1057
    %1350 = vmatprep.subr.bf16.mxu0 %v1062
    %1351 = vmatpush1.bf16.msra.mxu0 %v1061
    %1352 = vmatprep.subr.bf16.mxu0 %v1066
    %1353 = vmatpush1.bf16.msra.mxu0 %v1065
    %1354 = vmatprep.subr.bf16.mxu0 %v1070
    %1355 = vmatpush1.bf16.msra.mxu0 %v1069
    %1356 = vmatprep.subr.bf16.mxu0 %v1074
    %1357 = vmatpush1.bf16.msra.mxu0 %v1073
    %1358 = vmatprep.mubr.bf16.mxu0 %v412
    %1359 = vmatmul.mubr.bf16.gmra.mrb[0].mxu0 %v411
    %v1360 = vpop.f32.mrb[0].mxu0
    %v1361 = vadd.f32 %v1320, %v1360
    %v1362 = vpop.f32.mrb[0].mxu0
    %v1363 = vadd.f32 %v1322, %v1362
    %v1364 = vpop.f32.mrb[0].mxu0
    %v1365 = vpop.f32.mrb[0].mxu0
    %1366 = vdwg.mxu0
    %v1367 = vpack.c.bf16 %v1279, %v1279
    %v1368 = vpack.c.bf16 %v1281, %v1281
    %v1369 = vpack.c.bf16 %v1361, %v1361
    %v1370 = vpack.c.bf16 %v1363, %v1363
    %v1371 = vmul.bf16 %v1367, 1009007652
    %v1372 = vmul.bf16 %v1368, 1009007652
    %v1373 = vmul.bf16 %v1369, 1009007652
    %v1374 = vmul.bf16 %v1370, 1009007652
    %v1375 = vmax.bf16 %v1367, %v1371
    %v1376 = vmax.bf16 %v1368, %v1372
    %v1377 = vmax.bf16 %v1369, %v1373
    %v1378 = vmax.bf16 %v1370, %v1374
    %v1379 = vld [vmem:[#allocation10] sm:$0xff]
    %v1380 = vld [vmem:[#allocation10 + $0x8] sm:$0xf]
    %v1381 = vld [vmem:[#allocation10 + $0xc] sm:$0xff]
    %v1382 = vld [vmem:[#allocation10 + $0x14] sm:$0xf]
    %v1383 = vld [vmem:[#allocation10 + $0x18] sm:$0xff]
    %v1384 = vld [vmem:[#allocation10 + $0x20] sm:$0xf]
    %v1385 = vld [vmem:[#allocation10 + $0x24] sm:$0xff]
    %v1386 = vld [vmem:[#allocation10 + $0x2c] sm:$0xf]
    %v1387 = vld [vmem:[#allocation10 + $0x30] sm:$0xff]
    %v1388 = vld [vmem:[#allocation10 + $0x38] sm:$0xf]
    %v1389 = vld [vmem:[#allocation10 + $0x3c] sm:$0xff]
    %v1390 = vld [vmem:[#allocation10 + $0x44] sm:$0xf]
    %v1391 = vld [vmem:[#allocation10 + $0x48] sm:$0xff]
    %v1392 = vld [vmem:[#allocation10 + $0x50] sm:$0xf]
    %v1393 = vld [vmem:[#allocation10 + $0x54] sm:$0xff]
    %v1394 = vld [vmem:[#allocation10 + $0x5c] sm:$0xf]
    %v1395 = vld [vmem:[#allocation10 + $0x60] sm:$0xff]
    %v1396 = vld [vmem:[#allocation10 + $0x68] sm:$0xf]
    %v1397 = vld [vmem:[#allocation10 + $0x6c] sm:$0xff]
    %v1398 = vld [vmem:[#allocation10 + $0x74] sm:$0xf]
    %v1399 = vld [vmem:[#allocation10 + $0x78] sm:$0xff]
    %v1400 = vld [vmem:[#allocation10 + $0x80] sm:$0xf]
    %v1401 = vld [vmem:[#allocation10 + $0x84] sm:$0xff]
    %v1402 = vld [vmem:[#allocation10 + $0x8c] sm:$0xf]
    %v1403 = vld [vmem:[#allocation10 + $0x90] sm:$0xff]
    %v1404 = vld [vmem:[#allocation10 + $0x98] sm:$0xf]
    %v1405 = vld [vmem:[#allocation10 + $0x9c] sm:$0xff]
    %v1406 = vld [vmem:[#allocation10 + $0xa4] sm:$0xf]
    %v1407 = vld [vmem:[#allocation10 + $0xa8] sm:$0xff]
    %v1408 = vld [vmem:[#allocation10 + $0xb0] sm:$0xf]
    %v1409 = vld [vmem:[#allocation10 + $0xb4] sm:$0xff]
    %v1410 = vld [vmem:[#allocation10 + $0xbc] sm:$0xf]
    %v1411 = vld [vmem:[#allocation10 + $0xc0] sm:$0xff]
    %v1412 = vld [vmem:[#allocation10 + $0xc8] sm:$0xf]
    %v1413 = vld [vmem:[#allocation10 + $0xcc] sm:$0xff]
    %v1414 = vld [vmem:[#allocation10 + $0xd4] sm:$0xf]
    %v1415 = vld [vmem:[#allocation10 + $0xd8] sm:$0xff]
    %v1416 = vld [vmem:[#allocation10 + $0xe0] sm:$0xf]
    %v1417 = vld [vmem:[#allocation10 + $0xe4] sm:$0xff]
    %v1418 = vld [vmem:[#allocation10 + $0xec] sm:$0xf]
    %v1419 = vld [vmem:[#allocation10 + $0xf0] sm:$0xff]
    %v1420 = vld [vmem:[#allocation10 + $0xf8] sm:$0xf]
    %v1421 = vld [vmem:[#allocation10 + $0xfc] sm:$0xff]
    %v1422 = vld [vmem:[#allocation10 + $0x104] sm:$0xf]
    %v1423 = vld [vmem:[#allocation10 + $0x108] sm:$0xff]
    %v1424 = vld [vmem:[#allocation10 + $0x110] sm:$0xf]
    %v1425 = vld [vmem:[#allocation10 + $0x114] sm:$0xff]
    %v1426 = vld [vmem:[#allocation10 + $0x11c] sm:$0xf]
    %v1427 = vld [vmem:[#allocation10 + $0x120] sm:$0xff]
    %v1428 = vld [vmem:[#allocation10 + $0x128] sm:$0xf]
    %v1429 = vld [vmem:[#allocation10 + $0x12c] sm:$0xff]
    %v1430 = vld [vmem:[#allocation10 + $0x134] sm:$0xf]
    %v1431 = vld [vmem:[#allocation10 + $0x138] sm:$0xff]
    %v1432 = vld [vmem:[#allocation10 + $0x140] sm:$0xf]
    %v1433 = vld [vmem:[#allocation10 + $0x144] sm:$0xff]
    %v1434 = vld [vmem:[#allocation10 + $0x14c] sm:$0xf]
    %v1435 = vld [vmem:[#allocation10 + $0x150] sm:$0xff]
    %v1436 = vld [vmem:[#allocation10 + $0x158] sm:$0xf]
    %v1437 = vld [vmem:[#allocation10 + $0x15c] sm:$0xff]
    %v1438 = vld [vmem:[#allocation10 + $0x164] sm:$0xf]
    %v1439 = vld [vmem:[#allocation10 + $0x168] sm:$0xff]
    %v1440 = vld [vmem:[#allocation10 + $0x170] sm:$0xf]
    %v1441 = vld [vmem:[#allocation10 + $0x174] sm:$0xff]
    %v1442 = vld [vmem:[#allocation10 + $0x17c] sm:$0xf]
    %v1443 = vld [vmem:[#allocation10 + $0x180] sm:$0xff]
    %v1444 = vld [vmem:[#allocation10 + $0x188] sm:$0xf]
    %v1445 = vld [vmem:[#allocation10 + $0x18c] sm:$0xff]
    %v1446 = vld [vmem:[#allocation10 + $0x194] sm:$0xf]
    %v1447 = vld [vmem:[#allocation10 + $0x198] sm:$0xff]
    %v1448 = vld [vmem:[#allocation10 + $0x1a0] sm:$0xf]
    %v1449 = vld [vmem:[#allocation10 + $0x1a4] sm:$0xff]
    %v1450 = vld [vmem:[#allocation10 + $0x1ac] sm:$0xf]
    %v1451 = vld [vmem:[#allocation10 + $0x1b0] sm:$0xff]
    %v1452 = vld [vmem:[#allocation10 + $0x1b8] sm:$0xf]
    %v1453 = vld [vmem:[#allocation10 + $0x1bc] sm:$0xff]
    %v1454 = vld [vmem:[#allocation10 + $0x1c4] sm:$0xf]
    %v1455 = vld [vmem:[#allocation10 + $0x1c8] sm:$0xff]
    %v1456 = vld [vmem:[#allocation10 + $0x1d0] sm:$0xf]
    %v1457 = vld [vmem:[#allocation10 + $0x1d4] sm:$0xff]
    %v1458 = vld [vmem:[#allocation10 + $0x1dc] sm:$0xf]
    %v1459 = vld [vmem:[#allocation10 + $0x1e0] sm:$0xff]
    %v1460 = vld [vmem:[#allocation10 + $0x1e8] sm:$0xf]
    %v1461 = vld [vmem:[#allocation10 + $0x1ec] sm:$0xff]
    %v1462 = vld [vmem:[#allocation10 + $0x1f4] sm:$0xf]
    %v1463 = vld [vmem:[#allocation10 + $0x1f8] sm:$0xff]
    %v1464 = vld [vmem:[#allocation10 + $0x200] sm:$0xf]
    %v1465 = vld [vmem:[#allocation10 + $0x204] sm:$0xff]
    %v1466 = vld [vmem:[#allocation10 + $0x20c] sm:$0xf]
    %v1467 = vld [vmem:[#allocation10 + $0x210] sm:$0xff]
    %v1468 = vld [vmem:[#allocation10 + $0x218] sm:$0xf]
    %v1469 = vld [vmem:[#allocation10 + $0x21c] sm:$0xff]
    %v1470 = vld [vmem:[#allocation10 + $0x224] sm:$0xf]
    %v1471 = vld [vmem:[#allocation10 + $0x228] sm:$0xff]
    %v1472 = vld [vmem:[#allocation10 + $0x230] sm:$0xf]
    %v1473 = vld [vmem:[#allocation10 + $0x234] sm:$0xff]
    %v1474 = vld [vmem:[#allocation10 + $0x23c] sm:$0xf]
    %v1475 = vld [vmem:[#allocation10 + $0x240] sm:$0xff]
    %v1476 = vld [vmem:[#allocation10 + $0x248] sm:$0xf]
    %v1477 = vld [vmem:[#allocation10 + $0x24c] sm:$0xff]
    %v1478 = vld [vmem:[#allocation10 + $0x254] sm:$0xf]
    %v1479 = vld [vmem:[#allocation10 + $0x258] sm:$0xff]
    %v1480 = vld [vmem:[#allocation10 + $0x260] sm:$0xf]
    %v1481 = vld [vmem:[#allocation10 + $0x264] sm:$0xff]
    %v1482 = vld [vmem:[#allocation10 + $0x26c] sm:$0xf]
    %v1483 = vld [vmem:[#allocation10 + $0x270] sm:$0xff]
    %v1484 = vld [vmem:[#allocation10 + $0x278] sm:$0xf]
    %v1485 = vld [vmem:[#allocation10 + $0x27c] sm:$0xff]
    %v1486 = vld [vmem:[#allocation10 + $0x284] sm:$0xf]
    %v1487 = vld [vmem:[#allocation10 + $0x288] sm:$0xff]
    %v1488 = vld [vmem:[#allocation10 + $0x290] sm:$0xf]
    %v1489 = vld [vmem:[#allocation10 + $0x294] sm:$0xff]
    %v1490 = vld [vmem:[#allocation10 + $0x29c] sm:$0xf]
    %v1491 = vld [vmem:[#allocation10 + $0x2a0] sm:$0xff]
    %v1492 = vld [vmem:[#allocation10 + $0x2a8] sm:$0xf]
    %v1493 = vld [vmem:[#allocation10 + $0x2ac] sm:$0xff]
    %v1494 = vld [vmem:[#allocation10 + $0x2b4] sm:$0xf]
    %v1495 = vld [vmem:[#allocation10 + $0x2b8] sm:$0xff]
    %v1496 = vld [vmem:[#allocation10 + $0x2c0] sm:$0xf]
    %v1497 = vld [vmem:[#allocation10 + $0x2c4] sm:$0xff]
    %v1498 = vld [vmem:[#allocation10 + $0x2cc] sm:$0xf]
    %v1499 = vld [vmem:[#allocation10 + $0x2d0] sm:$0xff]
    %v1500 = vld [vmem:[#allocation10 + $0x2d8] sm:$0xf]
    %v1501 = vld [vmem:[#allocation10 + $0x2dc] sm:$0xff]
    %v1502 = vld [vmem:[#allocation10 + $0x2e4] sm:$0xf]
    %v1503 = vld [vmem:[#allocation10 + $0x2e8] sm:$0xff]
    %v1504 = vld [vmem:[#allocation10 + $0x2f0] sm:$0xf]
    %v1505 = vld [vmem:[#allocation10 + $0x2f4] sm:$0xff]
    %v1506 = vld [vmem:[#allocation10 + $0x2fc] sm:$0xf]
    %v1507 = vld [vmem:[%s7] sm:$0x7]
    %v1509 = vlaneseq
    %v1510 = vshrl.u32 %v1509, 7
    %v1511 = vsub.s32 0, %v1510
    %v1512 = vrot.slane %v1507, %v1511
    %v1513 = vlaneseq
    %v1514 = vshrl.u32 %v1513, 7
    %v1515 = vsub.s32 1, %v1514
    %v1516 = vrot.slane %v1507, %v1515
    %v1517 = vlaneseq
    %v1518 = vshrl.u32 %v1517, 7
    %v1519 = vsub.s32 2, %v1518
    %v1520 = vrot.slane %v1507, %v1519
    %v1652 = vunpack.c.l.b16 %v1379
    %v1653 = vunpack.c.h.b16 %v1379
    %v1654 = vunpack.c.l.b16 %v1380
    %v1655 = vunpack.c.l.b16 %v1381
    %v1656 = vunpack.c.h.b16 %v1381
    %v1657 = vunpack.c.l.b16 %v1382
    %v1658 = vunpack.c.l.b16 %v1383
    %v1659 = vunpack.c.h.b16 %v1383
    %v1660 = vunpack.c.l.b16 %v1384
    %v1661 = vunpack.c.l.b16 %v1385
    %v1662 = vunpack.c.h.b16 %v1385
    %v1663 = vunpack.c.l.b16 %v1386
    %v1664 = vunpack.c.l.b16 %v1387
    %v1665 = vunpack.c.h.b16 %v1387
    %v1666 = vunpack.c.l.b16 %v1388
    %v1667 = vunpack.c.l.b16 %v1389
    %v1668 = vunpack.c.h.b16 %v1389
    %v1669 = vunpack.c.l.b16 %v1390
    %v1670 = vunpack.c.l.b16 %v1391
    %v1671 = vunpack.c.h.b16 %v1391
    %v1672 = vunpack.c.l.b16 %v1392
    %v1673 = vunpack.c.l.b16 %v1393
    %v1674 = vunpack.c.h.b16 %v1393
    %v1675 = vunpack.c.l.b16 %v1394
    %v1676 = vunpack.c.l.b16 %v1395
    %v1677 = vunpack.c.h.b16 %v1395
    %v1678 = vunpack.c.l.b16 %v1396
    %v1679 = vunpack.c.l.b16 %v1397
    %v1680 = vunpack.c.h.b16 %v1397
    %v1681 = vunpack.c.l.b16 %v1398
    %v1682 = vunpack.c.l.b16 %v1399
    %v1683 = vunpack.c.h.b16 %v1399
    %v1684 = vunpack.c.l.b16 %v1400
    %v1685 = vunpack.c.l.b16 %v1401
    %v1686 = vunpack.c.h.b16 %v1401
    %v1687 = vunpack.c.l.b16 %v1402
    %v1688 = vunpack.c.l.b16 %v1403
    %v1689 = vunpack.c.h.b16 %v1403
    %v1690 = vunpack.c.l.b16 %v1404
    %v1691 = vunpack.c.l.b16 %v1405
    %v1692 = vunpack.c.h.b16 %v1405
    %v1693 = vunpack.c.l.b16 %v1406
    %v1694 = vunpack.c.l.b16 %v1407
    %v1695 = vunpack.c.h.b16 %v1407
    %v1696 = vunpack.c.l.b16 %v1408
    %v1697 = vunpack.c.l.b16 %v1409
    %v1698 = vunpack.c.h.b16 %v1409
    %v1699 = vunpack.c.l.b16 %v1410
    %v1700 = vunpack.c.l.b16 %v1411
    %v1701 = vunpack.c.h.b16 %v1411
    %v1702 = vunpack.c.l.b16 %v1412
    %v1703 = vunpack.c.l.b16 %v1413
    %v1704 = vunpack.c.h.b16 %v1413
    %v1705 = vunpack.c.l.b16 %v1414
    %v1706 = vunpack.c.l.b16 %v1415
    %v1707 = vunpack.c.h.b16 %v1415
    %v1708 = vunpack.c.l.b16 %v1416
    %v1709 = vunpack.c.l.b16 %v1417
    %v1710 = vunpack.c.h.b16 %v1417
    %v1711 = vunpack.c.l.b16 %v1418
    %v1712 = vunpack.c.l.b16 %v1419
    %v1713 = vunpack.c.h.b16 %v1419
    %v1714 = vunpack.c.l.b16 %v1420
    %v1715 = vunpack.c.l.b16 %v1421
    %v1716 = vunpack.c.h.b16 %v1421
    %v1717 = vunpack.c.l.b16 %v1422
    %v1718 = vunpack.c.l.b16 %v1423
    %v1719 = vunpack.c.h.b16 %v1423
    %v1720 = vunpack.c.l.b16 %v1424
    %v1721 = vunpack.c.l.b16 %v1425
    %v1722 = vunpack.c.h.b16 %v1425
    %v1723 = vunpack.c.l.b16 %v1426
    %v1724 = vunpack.c.l.b16 %v1427
    %v1725 = vunpack.c.h.b16 %v1427
    %v1726 = vunpack.c.l.b16 %v1428
    %v1727 = vunpack.c.l.b16 %v1429
    %v1728 = vunpack.c.h.b16 %v1429
    %v1729 = vunpack.c.l.b16 %v1430
    %v1730 = vunpack.c.l.b16 %v1431
    %v1731 = vunpack.c.h.b16 %v1431
    %v1732 = vunpack.c.l.b16 %v1432
    %v1733 = vunpack.c.l.b16 %v1433
    %v1734 = vunpack.c.h.b16 %v1433
    %v1735 = vunpack.c.l.b16 %v1434
    %v1736 = vunpack.c.l.b16 %v1435
    %v1737 = vunpack.c.h.b16 %v1435
    %v1738 = vunpack.c.l.b16 %v1436
    %v1739 = vunpack.c.l.b16 %v1437
    %v1740 = vunpack.c.h.b16 %v1437
    %v1741 = vunpack.c.l.b16 %v1438
    %v1742 = vunpack.c.l.b16 %v1439
    %v1743 = vunpack.c.h.b16 %v1439
    %v1744 = vunpack.c.l.b16 %v1440
    %v1745 = vunpack.c.l.b16 %v1441
    %v1746 = vunpack.c.h.b16 %v1441
    %v1747 = vunpack.c.l.b16 %v1442
    %v1748 = vunpack.c.l.b16 %v1443
    %v1749 = vunpack.c.h.b16 %v1443
    %v1750 = vunpack.c.l.b16 %v1444
    %v1751 = vunpack.c.l.b16 %v1445
    %v1752 = vunpack.c.h.b16 %v1445
    %v1753 = vunpack.c.l.b16 %v1446
    %v1754 = vunpack.c.l.b16 %v1447
    %v1755 = vunpack.c.h.b16 %v1447
    %v1756 = vunpack.c.l.b16 %v1448
    %v1757 = vunpack.c.l.b16 %v1449
    %v1758 = vunpack.c.h.b16 %v1449
    %v1759 = vunpack.c.l.b16 %v1450
    %v1760 = vunpack.c.l.b16 %v1451
    %v1761 = vunpack.c.h.b16 %v1451
    %v1762 = vunpack.c.l.b16 %v1452
    %v1763 = vunpack.c.l.b16 %v1453
    %v1764 = vunpack.c.h.b16 %v1453
    %v1765 = vunpack.c.l.b16 %v1454
    %v1766 = vunpack.c.l.b16 %v1455
    %v1767 = vunpack.c.h.b16 %v1455
    %v1768 = vunpack.c.l.b16 %v1456
    %v1769 = vunpack.c.l.b16 %v1457
    %v1770 = vunpack.c.h.b16 %v1457
    %v1771 = vunpack.c.l.b16 %v1458
    %v1772 = vunpack.c.l.b16 %v1459
    %v1773 = vunpack.c.h.b16 %v1459
    %v1774 = vunpack.c.l.b16 %v1460
    %v1775 = vunpack.c.l.b16 %v1461
    %v1776 = vunpack.c.h.b16 %v1461
    %v1777 = vunpack.c.l.b16 %v1462
    %v1778 = vunpack.c.l.b16 %v1463
    %v1779 = vunpack.c.h.b16 %v1463
    %v1780 = vunpack.c.l.b16 %v1464
    %v1781 = vunpack.c.l.b16 %v1465
    %v1782 = vunpack.c.h.b16 %v1465
    %v1783 = vunpack.c.l.b16 %v1466
    %v1784 = vunpack.c.l.b16 %v1467
    %v1785 = vunpack.c.h.b16 %v1467
    %v1786 = vunpack.c.l.b16 %v1468
    %v1787 = vunpack.c.l.b16 %v1469
    %v1788 = vunpack.c.h.b16 %v1469
    %v1789 = vunpack.c.l.b16 %v1470
    %v1790 = vunpack.c.l.b16 %v1471
    %v1791 = vunpack.c.h.b16 %v1471
    %v1792 = vunpack.c.l.b16 %v1472
    %v1793 = vunpack.c.l.b16 %v1473
    %v1794 = vunpack.c.h.b16 %v1473
    %v1795 = vunpack.c.l.b16 %v1474
    %v1796 = vunpack.c.l.b16 %v1475
    %v1797 = vunpack.c.h.b16 %v1475
    %v1798 = vunpack.c.l.b16 %v1476
    %v1799 = vunpack.c.l.b16 %v1477
    %v1800 = vunpack.c.h.b16 %v1477
    %v1801 = vunpack.c.l.b16 %v1478
    %v1802 = vunpack.c.l.b16 %v1479
    %v1803 = vunpack.c.h.b16 %v1479
    %v1804 = vunpack.c.l.b16 %v1480
    %v1805 = vunpack.c.l.b16 %v1481
    %v1806 = vunpack.c.h.b16 %v1481
    %v1807 = vunpack.c.l.b16 %v1482
    %v1808 = vunpack.c.l.b16 %v1483
    %v1809 = vunpack.c.h.b16 %v1483
    %v1810 = vunpack.c.l.b16 %v1484
    %v1811 = vunpack.c.l.b16 %v1485
    %v1812 = vunpack.c.h.b16 %v1485
    %v1813 = vunpack.c.l.b16 %v1486
    %v1814 = vunpack.c.l.b16 %v1487
    %v1815 = vunpack.c.h.b16 %v1487
    %v1816 = vunpack.c.l.b16 %v1488
    %v1817 = vunpack.c.l.b16 %v1489
    %v1818 = vunpack.c.h.b16 %v1489
    %v1819 = vunpack.c.l.b16 %v1490
    %v1820 = vunpack.c.l.b16 %v1491
    %v1821 = vunpack.c.h.b16 %v1491
    %v1822 = vunpack.c.l.b16 %v1492
    %v1823 = vunpack.c.l.b16 %v1493
    %v1824 = vunpack.c.h.b16 %v1493
    %v1825 = vunpack.c.l.b16 %v1494
    %v1826 = vunpack.c.l.b16 %v1495
    %v1827 = vunpack.c.h.b16 %v1495
    %v1828 = vunpack.c.l.b16 %v1496
    %v1829 = vunpack.c.l.b16 %v1497
    %v1830 = vunpack.c.h.b16 %v1497
    %v1831 = vunpack.c.l.b16 %v1498
    %v1832 = vunpack.c.l.b16 %v1499
    %v1833 = vunpack.c.h.b16 %v1499
    %v1834 = vunpack.c.l.b16 %v1500
    %v1835 = vunpack.c.l.b16 %v1501
    %v1836 = vunpack.c.h.b16 %v1501
    %v1837 = vunpack.c.l.b16 %v1502
    %v1838 = vunpack.c.l.b16 %v1503
    %v1839 = vunpack.c.h.b16 %v1503
    %v1840 = vunpack.c.l.b16 %v1504
    %v1841 = vunpack.c.l.b16 %v1505
    %v1842 = vunpack.c.h.b16 %v1505
    %v1843 = vunpack.c.l.b16 %v1506
    %v1844 = vpack.c.b16 %v1655, %v1652
    %v1845 = vpack.c.b16 %v1656, %v1653
    %v1846 = vpack.c.b16 %v1657, %v1654
    %v1847 = vpack.c.b16 %v1661, %v1658
    %v1848 = vpack.c.b16 %v1662, %v1659
    %v1849 = vpack.c.b16 %v1663, %v1660
    %v1850 = vpack.c.b16 %v1667, %v1664
    %v1851 = vpack.c.b16 %v1668, %v1665
    %v1852 = vpack.c.b16 %v1669, %v1666
    %v1853 = vpack.c.b16 %v1673, %v1670
    %v1854 = vpack.c.b16 %v1674, %v1671
    %v1855 = vpack.c.b16 %v1675, %v1672
    %v1856 = vpack.c.b16 %v1679, %v1676
    %v1857 = vpack.c.b16 %v1680, %v1677
    %v1858 = vpack.c.b16 %v1681, %v1678
    %v1859 = vpack.c.b16 %v1685, %v1682
    %v1860 = vpack.c.b16 %v1686, %v1683
    %v1861 = vpack.c.b16 %v1687, %v1684
    %v1862 = vpack.c.b16 %v1691, %v1688
    %v1863 = vpack.c.b16 %v1692, %v1689
    %v1864 = vpack.c.b16 %v1693, %v1690
    %v1865 = vpack.c.b16 %v1697, %v1694
    %v1866 = vpack.c.b16 %v1698, %v1695
    %v1867 = vpack.c.b16 %v1699, %v1696
    %v1868 = vpack.c.b16 %v1703, %v1700
    %v1869 = vpack.c.b16 %v1704, %v1701
    %v1870 = vpack.c.b16 %v1705, %v1702
    %v1871 = vpack.c.b16 %v1709, %v1706
    %v1872 = vpack.c.b16 %v1710, %v1707
    %v1873 = vpack.c.b16 %v1711, %v1708
    %v1874 = vpack.c.b16 %v1715, %v1712
    %v1875 = vpack.c.b16 %v1716, %v1713
    %v1876 = vpack.c.b16 %v1717, %v1714
    %v1877 = vpack.c.b16 %v1721, %v1718
    %v1878 = vpack.c.b16 %v1722, %v1719
    %v1879 = vpack.c.b16 %v1723, %v1720
    %v1880 = vpack.c.b16 %v1727, %v1724
    %v1881 = vpack.c.b16 %v1728, %v1725
    %v1882 = vpack.c.b16 %v1729, %v1726
    %v1883 = vpack.c.b16 %v1733, %v1730
    %v1884 = vpack.c.b16 %v1734, %v1731
    %v1885 = vpack.c.b16 %v1735, %v1732
    %v1886 = vpack.c.b16 %v1739, %v1736
    %v1887 = vpack.c.b16 %v1740, %v1737
    %v1888 = vpack.c.b16 %v1741, %v1738
    %v1889 = vpack.c.b16 %v1745, %v1742
    %v1890 = vpack.c.b16 %v1746, %v1743
    %v1891 = vpack.c.b16 %v1747, %v1744
    %v1892 = vpack.c.b16 %v1751, %v1748
    %v1893 = vpack.c.b16 %v1752, %v1749
    %v1894 = vpack.c.b16 %v1753, %v1750
    %v1895 = vpack.c.b16 %v1757, %v1754
    %v1896 = vpack.c.b16 %v1758, %v1755
    %v1897 = vpack.c.b16 %v1759, %v1756
    %v1898 = vpack.c.b16 %v1763, %v1760
    %v1899 = vpack.c.b16 %v1764, %v1761
    %v1900 = vpack.c.b16 %v1765, %v1762
    %v1901 = vpack.c.b16 %v1769, %v1766
    %v1902 = vpack.c.b16 %v1770, %v1767
    %v1903 = vpack.c.b16 %v1771, %v1768
    %v1904 = vpack.c.b16 %v1775, %v1772
    %v1905 = vpack.c.b16 %v1776, %v1773
    %v1906 = vpack.c.b16 %v1777, %v1774
    %v1907 = vpack.c.b16 %v1781, %v1778
    %v1908 = vpack.c.b16 %v1782, %v1779
    %v1909 = vpack.c.b16 %v1783, %v1780
    %v1910 = vpack.c.b16 %v1787, %v1784
    %v1911 = vpack.c.b16 %v1788, %v1785
    %v1912 = vpack.c.b16 %v1789, %v1786
    %v1913 = vpack.c.b16 %v1793, %v1790
    %v1914 = vpack.c.b16 %v1794, %v1791
    %v1915 = vpack.c.b16 %v1795, %v1792
    %v1916 = vpack.c.b16 %v1799, %v1796
    %v1917 = vpack.c.b16 %v1800, %v1797
    %v1918 = vpack.c.b16 %v1801, %v1798
    %v1919 = vpack.c.b16 %v1805, %v1802
    %v1920 = vpack.c.b16 %v1806, %v1803
    %v1921 = vpack.c.b16 %v1807, %v1804
    %v1922 = vpack.c.b16 %v1811, %v1808
    %v1923 = vpack.c.b16 %v1812, %v1809
    %v1924 = vpack.c.b16 %v1813, %v1810
    %v1925 = vpack.c.b16 %v1817, %v1814
    %v1926 = vpack.c.b16 %v1818, %v1815
    %v1927 = vpack.c.b16 %v1819, %v1816
    %v1928 = vpack.c.b16 %v1823, %v1820
    %v1929 = vpack.c.b16 %v1824, %v1821
    %v1930 = vpack.c.b16 %v1825, %v1822
    %v1931 = vpack.c.b16 %v1829, %v1826
    %v1932 = vpack.c.b16 %v1830, %v1827
    %v1933 = vpack.c.b16 %v1831, %v1828
    %v1934 = vpack.c.b16 %v1835, %v1832
    %v1935 = vpack.c.b16 %v1836, %v1833
    %v1936 = vpack.c.b16 %v1837, %v1834
    %v1937 = vpack.c.b16 %v1841, %v1838
    %v1938 = vpack.c.b16 %v1842, %v1839
    %v1939 = vpack.c.b16 %v1843, %v1840
    %2036 = vmatprep.subr.bf16.mxu0 %v1845
    %2037 = vmatpush1.bf16.msra.mxu0 %v1844
    %2038 = vmatprep.subr.bf16.mxu0 %v1848
    %2039 = vmatpush1.bf16.msra.mxu0 %v1847
    %2040 = vmatprep.subr.bf16.mxu0 %v1851
    %2041 = vmatpush1.bf16.msra.mxu0 %v1850
    %2042 = vmatprep.subr.bf16.mxu0 %v1854
    %2043 = vmatpush1.bf16.msra.mxu0 %v1853
    %2044 = vmatprep.subr.bf16.mxu0 %v1857
    %2045 = vmatpush1.bf16.msra.mxu0 %v1856
    %2046 = vmatprep.subr.bf16.mxu0 %v1860
    %2047 = vmatpush1.bf16.msra.mxu0 %v1859
    %2048 = vmatprep.subr.bf16.mxu0 %v1863
    %2049 = vmatpush1.bf16.msra.mxu0 %v1862
    %2050 = vmatprep.subr.bf16.mxu0 %v1866
    %2051 = vmatpush1.bf16.msra.mxu0 %v1865
    %2052 = vmatprep.subr.bf16.mxu0 %v1869
    %2053 = vmatpush1.bf16.msra.mxu0 %v1868
    %2054 = vmatprep.subr.bf16.mxu0 %v1872
    %2055 = vmatpush1.bf16.msra.mxu0 %v1871
    %2056 = vmatprep.subr.bf16.mxu0 %v1875
    %2057 = vmatpush1.bf16.msra.mxu0 %v1874
    %2058 = vmatprep.subr.bf16.mxu0 %v1878
    %2059 = vmatpush1.bf16.msra.mxu0 %v1877
    %2060 = vmatprep.subr.bf16.mxu0 %v1881
    %2061 = vmatpush1.bf16.msra.mxu0 %v1880
    %2062 = vmatprep.subr.bf16.mxu0 %v1884
    %2063 = vmatpush1.bf16.msra.mxu0 %v1883
    %2064 = vmatprep.subr.bf16.mxu0 %v1887
    %2065 = vmatpush1.bf16.msra.mxu0 %v1886
    %2066 = vmatprep.subr.bf16.mxu0 %v1890
    %2067 = vmatpush1.bf16.msra.mxu0 %v1889
    %2068 = vmatprep.mubr.bf16.mxu0 %v1376
    %2069 = vmatmul.mubr.bf16.gmra.mrb[0].mxu0 %v1375
    %v2070 = vpop.f32.mrb[0].mxu0
    %v2071 = vadd.f32 %v1512, %v2070
    %v2072 = vpop.f32.mrb[0].mxu0
    %v2073 = vadd.f32 %v1516, %v2072
    %v2074 = vpop.f32.mrb[0].mxu0
    %v2075 = vpop.f32.mrb[0].mxu0
    %2076 = vdwg.mxu0
    %2077 = vmatprep.subr.bf16.mxu0 %v1893
    %2078 = vmatpush1.bf16.msra.mxu0 %v1892
    %2079 = vmatprep.subr.bf16.mxu0 %v1896
    %2080 = vmatpush1.bf16.msra.mxu0 %v1895
    %2081 = vmatprep.subr.bf16.mxu0 %v1899
    %2082 = vmatpush1.bf16.msra.mxu0 %v1898
    %2083 = vmatprep.subr.bf16.mxu0 %v1902
    %2084 = vmatpush1.bf16.msra.mxu0 %v1901
    %2085 = vmatprep.subr.bf16.mxu0 %v1905
    %2086 = vmatpush1.bf16.msra.mxu0 %v1904
    %2087 = vmatprep.subr.bf16.mxu0 %v1908
    %2088 = vmatpush1.bf16.msra.mxu0 %v1907
    %2089 = vmatprep.subr.bf16.mxu0 %v1911
    %2090 = vmatpush1.bf16.msra.mxu0 %v1910
    %2091 = vmatprep.subr.bf16.mxu0 %v1914
    %2092 = vmatpush1.bf16.msra.mxu0 %v1913
    %2093 = vmatprep.subr.bf16.mxu0 %v1917
    %2094 = vmatpush1.bf16.msra.mxu0 %v1916
    %2095 = vmatprep.subr.bf16.mxu0 %v1920
    %2096 = vmatpush1.bf16.msra.mxu0 %v1919
    %2097 = vmatprep.subr.bf16.mxu0 %v1923
    %2098 = vmatpush1.bf16.msra.mxu0 %v1922
    %2099 = vmatprep.subr.bf16.mxu0 %v1926
    %2100 = vmatpush1.bf16.msra.mxu0 %v1925
    %2101 = vmatprep.subr.bf16.mxu0 %v1929
    %2102 = vmatpush1.bf16.msra.mxu0 %v1928
    %2103 = vmatprep.subr.bf16.mxu0 %v1932
    %2104 = vmatpush1.bf16.msra.mxu0 %v1931
    %2105 = vmatprep.subr.bf16.mxu0 %v1935
    %2106 = vmatpush1.bf16.msra.mxu0 %v1934
    %2107 = vmatprep.subr.bf16.mxu0 %v1938
    %2108 = vmatpush1.bf16.msra.mxu0 %v1937
    %2109 = vmatprep.mubr.bf16.mxu0 %v1378
    %2110 = vmatmul.mubr.bf16.gmra.mrb[0].mxu0 %v1377
    %v2111 = vpop.f32.mrb[0].mxu0
    %v2112 = vadd.f32 %v2071, %v2111
    %v2113 = vpop.f32.mrb[0].mxu0
    %v2114 = vadd.f32 %v2073, %v2113
    %v2115 = vpop.f32.mrb[0].mxu0
    %v2116 = vpop.f32.mrb[0].mxu0
    %2117 = vdwg.mxu0
    %2118 = vmatprep.subr.bf16.mxu0 0
    %2119 = vmatpush1.bf16.msra.mxu0 %v1846
    %2120 = vmatprep.subr.bf16.mxu0 0
    %2121 = vmatpush1.bf16.msra.mxu0 %v1849
    %2122 = vmatprep.subr.bf16.mxu0 0
    %2123 = vmatpush1.bf16.msra.mxu0 %v1852
    %2124 = vmatprep.subr.bf16.mxu0 0
    %2125 = vmatpush1.bf16.msra.mxu0 %v1855
    %2126 = vmatprep.subr.bf16.mxu0 0
    %2127 = vmatpush1.bf16.msra.mxu0 %v1858
    %2128 = vmatprep.subr.bf16.mxu0 0
    %2129 = vmatpush1.bf16.msra.mxu0 %v1861
    %2130 = vmatprep.subr.bf16.mxu0 0
    %2131 = vmatpush1.bf16.msra.mxu0 %v1864
    %2132 = vmatprep.subr.bf16.mxu0 0
    %2133 = vmatpush1.bf16.msra.mxu0 %v1867
    %2134 = vmatprep.subr.bf16.mxu0 0
    %2135 = vmatpush1.bf16.msra.mxu0 %v1870
    %2136 = vmatprep.subr.bf16.mxu0 0
    %2137 = vmatpush1.bf16.msra.mxu0 %v1873
    %2138 = vmatprep.subr.bf16.mxu0 0
    %2139 = vmatpush1.bf16.msra.mxu0 %v1876
    %2140 = vmatprep.subr.bf16.mxu0 0
    %2141 = vmatpush1.bf16.msra.mxu0 %v1879
    %2142 = vmatprep.subr.bf16.mxu0 0
    %2143 = vmatpush1.bf16.msra.mxu0 %v1882
    %2144 = vmatprep.subr.bf16.mxu0 0
    %2145 = vmatpush1.bf16.msra.mxu0 %v1885
    %2146 = vmatprep.subr.bf16.mxu0 0
    %2147 = vmatpush1.bf16.msra.mxu0 %v1888
    %2148 = vmatprep.subr.bf16.mxu0 0
    %2149 = vmatpush1.bf16.msra.mxu0 %v1891
    %2150 = vmatprep.mubr.bf16.mxu0 %v1376
    %2151 = vmatmul.mubr.bf16.gmra.mrb[0].mxu0 %v1375
    %v2152 = vpop.f32.mrb[0].mxu0
    %v2153 = vadd.f32 %v1520, %v2152
    %v2154 = vpop.f32.mrb[0].mxu0
    %v2155 = vpop.f32.mrb[0].mxu0
    %v2156 = vpop.f32.mrb[0].mxu0
    %2157 = vdwg.mxu0
    %2158 = vmatprep.subr.bf16.mxu0 0
    %2159 = vmatpush1.bf16.msra.mxu0 %v1894
    %2160 = vmatprep.subr.bf16.mxu0 0
    %2161 = vmatpush1.bf16.msra.mxu0 %v1897
    %2162 = vmatprep.subr.bf16.mxu0 0
    %2163 = vmatpush1.bf16.msra.mxu0 %v1900
    %2164 = vmatprep.subr.bf16.mxu0 0
    %2165 = vmatpush1.bf16.msra.mxu0 %v1903
    %2166 = vmatprep.subr.bf16.mxu0 0
    %2167 = vmatpush1.bf16.msra.mxu0 %v1906
    %2168 = vmatprep.subr.bf16.mxu0 0
    %2169 = vmatpush1.bf16.msra.mxu0 %v1909
    %2170 = vmatprep.subr.bf16.mxu0 0
    %2171 = vmatpush1.bf16.msra.mxu0 %v1912
    %2172 = vmatprep.subr.bf16.mxu0 0
    %2173 = vmatpush1.bf16.msra.mxu0 %v1915
    %2174 = vmatprep.subr.bf16.mxu0 0
    %2175 = vmatpush1.bf16.msra.mxu0 %v1918
    %2176 = vmatprep.subr.bf16.mxu0 0
    %2177 = vmatpush1.bf16.msra.mxu0 %v1921
    %2178 = vmatprep.subr.bf16.mxu0 0
    %2179 = vmatpush1.bf16.msra.mxu0 %v1924
    %2180 = vmatprep.subr.bf16.mxu0 0
    %2181 = vmatpush1.bf16.msra.mxu0 %v1927
    %2182 = vmatprep.subr.bf16.mxu0 0
    %2183 = vmatpush1.bf16.msra.mxu0 %v1930
    %2184 = vmatprep.subr.bf16.mxu0 0
    %2185 = vmatpush1.bf16.msra.mxu0 %v1933
    %2186 = vmatprep.subr.bf16.mxu0 0
    %2187 = vmatpush1.bf16.msra.mxu0 %v1936
    %2188 = vmatprep.subr.bf16.mxu0 0
    %2189 = vmatpush1.bf16.msra.mxu0 %v1939
    %2190 = vmatprep.mubr.bf16.mxu0 %v1378
    %2191 = vmatmul.mubr.bf16.gmra.mrb[0].mxu0 %v1377
    %v2192 = vpop.f32.mrb[0].mxu0
    %v2193 = vadd.f32 %v2153, %v2192
    %v2194 = vpop.f32.mrb[0].mxu0
    %v2195 = vpop.f32.mrb[0].mxu0
    %v2196 = vpop.f32.mrb[0].mxu0
    %2197 = vdwg.mxu0
    %v2198 = vtanh.pop %v2112
    %v2199 = vtanh.pop %v2114
    %v2200 = vtanh.pop %v2193
    %v2201 = vpack.c.bf16 %v2198, %v2198
    %v2202 = vpack.c.bf16 %v2199, %v2199
    %v2203 = vpack.c.bf16 %v2200, %v2200
    %v2204 = vld [vmem:[#allocation12] sm:$0xf]
    %v2205 = vld [vmem:[#allocation12 + $0x4] sm:$0xf]
    %v2206 = vld [vmem:[#allocation12 + $0x8] sm:$0xf]
    %v2207 = vld [vmem:[#allocation12 + $0xc] sm:$0xf]
    %v2208 = vld [vmem:[#allocation12 + $0x10] sm:$0xf]
    %v2209 = vld [vmem:[#allocation12 + $0x14] sm:$0xf]
    %v2210 = vld [vmem:[#allocation12 + $0x18] sm:$0xf]
    %v2211 = vld [vmem:[#allocation12 + $0x1c] sm:$0xf]
    %v2212 = vld [vmem:[#allocation12 + $0x20] sm:$0xf]
    %v2213 = vld [vmem:[#allocation12 + $0x24] sm:$0xf]
    %v2214 = vld [vmem:[#allocation12 + $0x28] sm:$0xf]
    %v2215 = vld [vmem:[#allocation12 + $0x2c] sm:$0xf]
    %v2216 = vld [vmem:[#allocation12 + $0x30] sm:$0xf]
    %v2217 = vld [vmem:[#allocation12 + $0x34] sm:$0xf]
    %v2218 = vld [vmem:[#allocation12 + $0x38] sm:$0xf]
    %v2219 = vld [vmem:[#allocation12 + $0x3c] sm:$0xf]
    %v2220 = vld [vmem:[#allocation12 + $0x40] sm:$0xf]
    %v2221 = vld [vmem:[#allocation12 + $0x44] sm:$0xf]
    %v2222 = vld [vmem:[#allocation12 + $0x48] sm:$0xf]
    %v2223 = vld [vmem:[#allocation12 + $0x4c] sm:$0xf]
    %v2224 = vld [vmem:[#allocation12 + $0x50] sm:$0xf]
    %v2225 = vld [vmem:[#allocation12 + $0x54] sm:$0xf]
    %v2226 = vld [vmem:[#allocation12 + $0x58] sm:$0xf]
    %v2227 = vld [vmem:[#allocation12 + $0x5c] sm:$0xf]
    %v2228 = vld [vmem:[#allocation12 + $0x60] sm:$0xf]
    %v2229 = vld [vmem:[#allocation12 + $0x64] sm:$0xf]
    %v2230 = vld [vmem:[#allocation12 + $0x68] sm:$0xf]
    %v2231 = vld [vmem:[#allocation12 + $0x6c] sm:$0xf]
    %v2232 = vld [vmem:[#allocation12 + $0x70] sm:$0xf]
    %v2233 = vld [vmem:[#allocation12 + $0x74] sm:$0xf]
    %v2234 = vld [vmem:[#allocation12 + $0x78] sm:$0xf]
    %v2235 = vld [vmem:[#allocation12 + $0x7c] sm:$0xf]
    %v2236 = vld [vmem:[#allocation12 + $0x80] sm:$0xf]
    %v2237 = vld [vmem:[#allocation12 + $0x84] sm:$0xf]
    %v2238 = vld [vmem:[#allocation12 + $0x88] sm:$0xf]
    %v2239 = vld [vmem:[#allocation12 + $0x8c] sm:$0xf]
    %v2240 = vld [vmem:[#allocation12 + $0x90] sm:$0xf]
    %v2241 = vld [vmem:[#allocation12 + $0x94] sm:$0xf]
    %v2242 = vld [vmem:[#allocation12 + $0x98] sm:$0xf]
    %v2243 = vld [vmem:[#allocation12 + $0x9c] sm:$0xf]
    %v2244 = vld [vmem:[#allocation12 + $0xa0] sm:$0xf]
    %v2245 = vld [vmem:[#allocation12 + $0xa4] sm:$0xf]
    %v2246 = vld [vmem:[#allocation12 + $0xa8] sm:$0xf]
    %v2247 = vld [vmem:[#allocation12 + $0xac] sm:$0xf]
    %v2248 = vld [vmem:[#allocation12 + $0xb0] sm:$0xf]
    %v2249 = vld [vmem:[#allocation12 + $0xb4] sm:$0xf]
    %v2250 = vld [vmem:[#allocation12 + $0xb8] sm:$0xf]
    %v2251 = vld [vmem:[#allocation12 + $0xbc] sm:$0xf]
    %v2252 = vld [vmem:[%s9] sm:$0x1]
    %v2254 = vlaneseq
    %v2255 = vshrl.u32 %v2254, 7
    %v2256 = vsub.s32 0, %v2255
    %v2257 = vrot.slane %v2252, %v2256
    %v2307 = vunpack.c.l.b16 %v2204
    %v2308 = vunpack.c.l.b16 %v2205
    %v2309 = vunpack.c.l.b16 %v2206
    %v2310 = vunpack.c.l.b16 %v2207
    %v2311 = vunpack.c.l.b16 %v2208
    %v2312 = vunpack.c.l.b16 %v2209
    %v2313 = vunpack.c.l.b16 %v2210
    %v2314 = vunpack.c.l.b16 %v2211
    %v2315 = vunpack.c.l.b16 %v2212
    %v2316 = vunpack.c.l.b16 %v2213
    %v2317 = vunpack.c.l.b16 %v2214
    %v2318 = vunpack.c.l.b16 %v2215
    %v2319 = vunpack.c.l.b16 %v2216
    %v2320 = vunpack.c.l.b16 %v2217
    %v2321 = vunpack.c.l.b16 %v2218
    %v2322 = vunpack.c.l.b16 %v2219
    %v2323 = vunpack.c.l.b16 %v2220
    %v2324 = vunpack.c.l.b16 %v2221
    %v2325 = vunpack.c.l.b16 %v2222
    %v2326 = vunpack.c.l.b16 %v2223
    %v2327 = vunpack.c.l.b16 %v2224
    %v2328 = vunpack.c.l.b16 %v2225
    %v2329 = vunpack.c.l.b16 %v2226
    %v2330 = vunpack.c.l.b16 %v2227
    %v2331 = vunpack.c.l.b16 %v2228
    %v2332 = vunpack.c.l.b16 %v2229
    %v2333 = vunpack.c.l.b16 %v2230
    %v2334 = vunpack.c.l.b16 %v2231
    %v2335 = vunpack.c.l.b16 %v2232
    %v2336 = vunpack.c.l.b16 %v2233
    %v2337 = vunpack.c.l.b16 %v2234
    %v2338 = vunpack.c.l.b16 %v2235
    %v2339 = vunpack.c.l.b16 %v2236
    %v2340 = vunpack.c.l.b16 %v2237
    %v2341 = vunpack.c.l.b16 %v2238
    %v2342 = vunpack.c.l.b16 %v2239
    %v2343 = vunpack.c.l.b16 %v2240
    %v2344 = vunpack.c.l.b16 %v2241
    %v2345 = vunpack.c.l.b16 %v2242
    %v2346 = vunpack.c.l.b16 %v2243
    %v2347 = vunpack.c.l.b16 %v2244
    %v2348 = vunpack.c.l.b16 %v2245
    %v2349 = vunpack.c.l.b16 %v2246
    %v2350 = vunpack.c.l.b16 %v2247
    %v2351 = vunpack.c.l.b16 %v2248
    %v2352 = vunpack.c.l.b16 %v2249
    %v2353 = vunpack.c.l.b16 %v2250
    %v2354 = vunpack.c.l.b16 %v2251
    %v2355 = vpack.c.b16 %v2308, %v2307
    %v2356 = vpack.c.b16 %v2310, %v2309
    %v2357 = vpack.c.b16 %v2312, %v2311
    %v2358 = vpack.c.b16 %v2314, %v2313
    %v2359 = vpack.c.b16 %v2316, %v2315
    %v2360 = vpack.c.b16 %v2318, %v2317
    %v2361 = vpack.c.b16 %v2320, %v2319
    %v2362 = vpack.c.b16 %v2322, %v2321
    %v2363 = vpack.c.b16 %v2324, %v2323
    %v2364 = vpack.c.b16 %v2326, %v2325
    %v2365 = vpack.c.b16 %v2328, %v2327
    %v2366 = vpack.c.b16 %v2330, %v2329
    %v2367 = vpack.c.b16 %v2332, %v2331
    %v2368 = vpack.c.b16 %v2334, %v2333
    %v2369 = vpack.c.b16 %v2336, %v2335
    %v2370 = vpack.c.b16 %v2338, %v2337
    %v2371 = vpack.c.b16 %v2340, %v2339
    %v2372 = vpack.c.b16 %v2342, %v2341
    %v2373 = vpack.c.b16 %v2344, %v2343
    %v2374 = vpack.c.b16 %v2346, %v2345
    %v2375 = vpack.c.b16 %v2348, %v2347
    %v2376 = vpack.c.b16 %v2350, %v2349
    %v2377 = vpack.c.b16 %v2352, %v2351
    %v2378 = vpack.c.b16 %v2354, %v2353
    %2403 = vmatprep.subr.bf16.mxu0 0
    %2404 = vmatpush1.bf16.msra.mxu0 %v2355
    %2405 = vmatprep.subr.bf16.mxu0 0
    %2406 = vmatpush1.bf16.msra.mxu0 %v2356
    %2407 = vmatprep.subr.bf16.mxu0 0
    %2408 = vmatpush1.bf16.msra.mxu0 %v2357
    %2409 = vmatprep.subr.bf16.mxu0 0
    %2410 = vmatpush1.bf16.msra.mxu0 %v2358
    %2411 = vmatprep.subr.bf16.mxu0 0
    %2412 = vmatpush1.bf16.msra.mxu0 %v2359
    %2413 = vmatprep.subr.bf16.mxu0 0
    %2414 = vmatpush1.bf16.msra.mxu0 %v2360
    %2415 = vmatprep.subr.bf16.mxu0 0
    %2416 = vmatpush1.bf16.msra.mxu0 %v2361
    %2417 = vmatprep.subr.bf16.mxu0 0
    %2418 = vmatpush1.bf16.msra.mxu0 %v2362
    %2419 = vmatprep.subr.bf16.mxu0 0
    %2420 = vmatpush1.bf16.msra.mxu0 %v2363
    %2421 = vmatprep.subr.bf16.mxu0 0
    %2422 = vmatpush1.bf16.msra.mxu0 %v2364
    %2423 = vmatprep.subr.bf16.mxu0 0
    %2424 = vmatpush1.bf16.msra.mxu0 %v2365
    %2425 = vmatprep.subr.bf16.mxu0 0
    %2426 = vmatpush1.bf16.msra.mxu0 %v2366
    %2427 = vmatprep.subr.bf16.mxu0 0
    %2428 = vmatpush1.bf16.msra.mxu0 %v2367
    %2429 = vmatprep.subr.bf16.mxu0 0
    %2430 = vmatpush1.bf16.msra.mxu0 %v2368
    %2431 = vmatprep.subr.bf16.mxu0 0
    %2432 = vmatpush1.bf16.msra.mxu0 %v2369
    %2433 = vmatprep.subr.bf16.mxu0 0
    %2434 = vmatpush1.bf16.msra.mxu0 %v2370
    %2435 = vmatprep.mubr.bf16.mxu0 %v2202
    %2436 = vmatmul.mubr.bf16.gmra.mrb[0].mxu0 %v2201
    %v2437 = vpop.f32.mrb[0].mxu0
    %v2438 = vadd.f32 %v2257, %v2437
    %v2439 = vpop.f32.mrb[0].mxu0
    %v2440 = vpop.f32.mrb[0].mxu0
    %v2441 = vpop.f32.mrb[0].mxu0
    %2442 = vdwg.mxu0
    %2443 = vmatprep.subr.bf16.mxu0 0
    %2444 = vmatpush1.bf16.msra.mxu0 %v2371
    %2445 = vmatprep.subr.bf16.mxu0 0
    %2446 = vmatpush1.bf16.msra.mxu0 %v2372
    %2447 = vmatprep.subr.bf16.mxu0 0
    %2448 = vmatpush1.bf16.msra.mxu0 %v2373
    %2449 = vmatprep.subr.bf16.mxu0 0
    %2450 = vmatpush1.bf16.msra.mxu0 %v2374
    %2451 = vmatprep.subr.bf16.mxu0 0
    %2452 = vmatpush1.bf16.msra.mxu0 %v2375
    %2453 = vmatprep.subr.bf16.mxu0 0
    %2454 = vmatpush1.bf16.msra.mxu0 %v2376
    %2455 = vmatprep.subr.bf16.mxu0 0
    %2456 = vmatpush1.bf16.msra.mxu0 %v2377
    %2457 = vmatprep.subr.bf16.mxu0 0
    %2458 = vmatpush1.bf16.msra.mxu0 %v2378
    %2459 = vmatprep.subr.bf16.mxu0 0
    %2460 = vmatpush1.bf16.msra.mxu0 0
    %2461 = vmatprep.subr.bf16.mxu0 0
    %2462 = vmatpush1.bf16.msra.mxu0 0
    %2463 = vmatprep.subr.bf16.mxu0 0
    %2464 = vmatpush1.bf16.msra.mxu0 0
    %2465 = vmatprep.subr.bf16.mxu0 0
    %2466 = vmatpush1.bf16.msra.mxu0 0
    %2467 = vmatprep.subr.bf16.mxu0 0
    %2468 = vmatpush1.bf16.msra.mxu0 0
    %2469 = vmatprep.subr.bf16.mxu0 0
    %2470 = vmatpush1.bf16.msra.mxu0 0
    %2471 = vmatprep.subr.bf16.mxu0 0
    %2472 = vmatpush1.bf16.msra.mxu0 0
    %2473 = vmatprep.subr.bf16.mxu0 0
    %2474 = vmatpush1.bf16.msra.mxu0 0
    %2475 = vmatprep.mubr.bf16.mxu0 0
    %2476 = vmatmul.mubr.bf16.gmra.mrb[0].mxu0 %v2203
    %v2477 = vpop.f32.mrb[0].mxu0
    %v2478 = vadd.f32 %v2438, %v2477
    %v2479 = vpop.f32.mrb[0].mxu0
    %v2480 = vpop.f32.mrb[0].mxu0
    %v2481 = vpop.f32.mrb[0].mxu0
    %2482 = vdwg.mxu0
    %v2483 = vtanh.pop %v2478
    %v2484 = vstv %s103
    %v2485 = vmul.f32 %v2484, %v2483
    %2486 = vst [vmem:[#allocation13] sm:$0xff] %v2485
    // Predicated region
    $region58: #{tpu_custom_call.1} parent=1 // pred_check
      _
    $region59: #{tpu_custom_call.1} parent=1 // pred_check_branch
      %2488 = sbr.rel (0) target = $region61
    $region60: #{tpu_custom_call.1} parent=1 // pred_region
      %s2490 = ssub.s32 128, 128
      %2491 = vsyncadd [#allocation6], %s2490
      %s2493 = sshll.u32 [#allocation13], 4
      %s2494 = int_to_ptr.vmem [resolvable:$true] %s2493
      %2496 = dma.vmem_to_hbm [thread:$0]  %s2494, 128, %s10, [#allocation6]
    $region61: #{tpu_custom_call.1} parent=1 // pred_fallthru
      _
    // Predicated region
    $region62: #{tpu_custom_call.1} parent=1 // pred_check
      _
    $region63: #{tpu_custom_call.1} parent=1 // pred_check_branch
      %2498 = sbr.rel (0) target = $region65
    $region64: #{tpu_custom_call.1} parent=1 // pred_region
      %2499 = dma.done [#allocation6], 128
    $region65: #{tpu_custom_call.1} parent=1 // pred_fallthru
      _
    %2500 = vsyncpa [#allocation5], 1
    %2501 = vsyncpa [#allocation8], 1
    %2502 = vsyncpa [#allocation11], 1
    %2503 = vsyncpa [#allocation6], 1

</llo_original>
